<compile_context>
chip_gen: v7x
topology: tpu7x:2x2x1
jax: 0.10.0
libtpu: 0.0.40
codegen_flags: <defaults>
</compile_context>

<pallas_src>
import numpy as np
import jax
import jax.numpy as jnp
from jax import lax
from jax.experimental import pallas as pl
from jax.experimental.pallas import tpu as pltpu

EPS = 1e-5          # BatchNorm2d default eps
LEAK = 0.1          # SpikingNeuron leak_rate
THRESHOLD = 1.0     # SpikingNeuron threshold
N_INPUTS = 13       # x + 11 bf16 weight matrices + 1 packed f32 vector slab

# rows of the packed (N_ROWS, Cout) f32 vector slab
(R_CONV1_B, R_BN1_G, R_BN1_B, R_CONV2_B, R_BN2_G, R_BN2_B,
 R_CTRL_B1, R_CTRL_B2, R_GATE_B, R_SC_G, R_SC_B,
 R_PR_B1, R_PR_G, R_PR_BE, R_PR_B2, R_CONF_W,
 R_SA_W_AVG, R_SA_W_MAX, R_SA_B, R_CONF_B, N_ROWS) = range(21)


def _bn_train(x, gamma, beta):
    # BatchNorm2d, training mode: per-channel batch stats over (N, H, W); H=W=1.
    mean = jnp.mean(x, axis=0, keepdims=True)
    var = jnp.mean((x - mean) ** 2, axis=0, keepdims=True)   # biased variance
    return (x - mean) * lax.rsqrt(var + EPS) * gamma + beta


def _fractal_math(x, w1sc, w2, ca_w1, ca_w2, ctrl_w1, ctrl_w2,
                  mem_keys_t, mem, gate_w, pr_w1, pr_w2, vec, *, in_kernel):
    """Whole AdvancedFractalUnit forward on (B, C) tiles (traced inside the kernel)."""
    C = w2.shape[0]
    # bf16 x bf16 -> f32 accumulation on the MXU
    dot = lambda a, b: jnp.dot(a.astype(jnp.bfloat16), b,
                               preferred_element_type=jnp.float32)
    r = lambda i: vec[i:i + 1, :]       # (1, C) row of the packed slab
    s = lambda i: vec[i:i + 1, 0:1]     # (1, 1) scalar from the packed slab

    # fused: conv1 centre tap + shortcut 1x1 conv share the x matmul
    xw = dot(x, w1sc)                                    # (B, 2C)
    h = xw[:, :C] + r(R_CONV1_B)
    identity = _bn_train(xw[:, C:], r(R_SC_G), r(R_SC_B))

    # conv1 -> bn1 -> relu ; conv2 -> bn2   (3x3 'same' conv == centre tap at 1x1)
    h = jnp.maximum(_bn_train(h, r(R_BN1_G), r(R_BN1_B)), 0.0)
    h = dot(h, w2) + r(R_CONV2_B)
    h = _bn_train(h, r(R_BN2_G), r(R_BN2_B))

    # ChannelAttention: adaptive avg/max pool over a 1x1 map are both identity,
    # so avg_mlp == max_mlp -> compute the MLP once and use sigmoid(2*mlp).
    mlp = dot(jnp.maximum(dot(h, ca_w1), 0.0), ca_w2)
    h = h * jax.nn.sigmoid(2.0 * mlp)

    # SpatialAttention: 7x7 'same' conv on a 1x1 map -> centre tap only
    avg_c = jnp.mean(h, axis=1, keepdims=True)
    max_c = jnp.max(h, axis=1, keepdims=True)
    attn_map = jax.nn.sigmoid(avg_c * s(R_SA_W_AVG) + max_c * s(R_SA_W_MAX) + s(R_SA_B))
    h = h * attn_map

    # MemoryModule (1/sqrt(C) softmax scale already folded into mem_keys_t)
    q = jnp.maximum(dot(h, ctrl_w1) + r(R_CTRL_B1), 0.0)
    q = dot(q, ctrl_w2) + r(R_CTRL_B2)
    logits = dot(q, mem_keys_t)
    logits = logits - jnp.max(logits, axis=1, keepdims=True)
    e = jnp.exp(logits)
    denom = jnp.sum(e, axis=1, keepdims=True)
    inv = pl.reciprocal(denom, approx=True) if in_kernel else 1.0 / denom
    attn = e * inv
    retrieved = dot(attn, mem)
    gate_in = jnp.concatenate([h, retrieved], axis=1)     # fused gate matmul
    gate = jax.nn.sigmoid(dot(gate_in, gate_w) + r(R_GATE_B))
    mem_out = gate * retrieved + (1.0 - gate) * h
    # TODO(synk): the torch.no_grad in-place EMA update of MemoryModule.memory is a
    # parameter side effect that does not affect this forward's outputs; skipped.

    # SpikingNeurons, fresh state (first step): membrane = leak * x;
    # firing_rate == spikes on step 1 and spikes are 0/1, so spikes*firing_rate == spikes.
    spike_out = (LEAK * mem_out >= THRESHOLD).astype(jnp.float32)

    # SelfSupervisedPredictor: 1x1 conv -> BN -> relu -> 1x1 conv, confidence head
    p = dot(spike_out, pr_w1) + r(R_PR_B1)
    p = jnp.maximum(_bn_train(p, r(R_PR_G), r(R_PR_BE)), 0.0)
    pred = dot(p, pr_w2) + r(R_PR_B2)
    conf = jax.nn.sigmoid(jnp.sum(pred * r(R_CONF_W), axis=1, keepdims=True) + s(R_CONF_B))

    # TODO(synk): data-dependent recursive expansion (should_expand / dynamic child
    # AdvancedFractalUnit creation, which calls an undefined estimate_complexity)
    # is skipped -> deterministic non-expanding path.
    out = jnp.maximum(spike_out + identity, 0.0)
    return out, attn, spike_out, conf


def _fractal_kernel(*refs):
    in_refs, out_ref = refs[:N_INPUTS], refs[N_INPUTS]
    vals = [ref[...] for ref in in_refs]
    out, attn, spike, conf = _fractal_math(*vals, in_kernel=True)
    C = out.shape[1]
    M = attn.shape[1]
    # lane-dense packed output slab: [out | spike | attn | conf | zero pad]
    out_ref[...] = jnp.zeros_like(out_ref)
    out_ref[:, 0:C] = out
    out_ref[:, C:2 * C] = spike
    out_ref[:, 2 * C:2 * C + M] = attn
    out_ref[:, 2 * C + M:2 * C + M + 1] = conf


def init_params(key, cin, cout, mem_size=64, reduction=16):
    hid = cout // reduction
    assert hid >= 1, "out_channels must be >= reduction for ChannelAttention"
    keys = iter(jax.random.split(key, 32))
    r = lambda shape, s=0.25: (s * jax.random.normal(next(keys), shape)).astype(jnp.float32)
    ones = lambda n: jnp.ones((n,), jnp.float32)
    zeros = lambda n: jnp.zeros((n,), jnp.float32)
    return {
        "conv1_w": r((cout, cin, 3, 3)), "conv1_b": r((cout,)),
        "bn1_g": ones(cout), "bn1_b": zeros(cout),
        "conv2_w": r((cout, cout, 3, 3)), "conv2_b": r((cout,)),
        "bn2_g": ones(cout), "bn2_b": zeros(cout),
        "ca_w1": r((hid, cout)), "ca_w2": r((cout, hid)),
        "sa_w": r((1, 2, 7, 7)), "sa_b": r((1,)),
        "memory": r((mem_size, cout), 1.0), "memory_keys": r((mem_size, cout), 1.0),
        "ctrl_w1": r((cout, cout)), "ctrl_b1": r((cout,)),
        "ctrl_w2": r((cout, cout)), "ctrl_b2": r((cout,)),
        "gate_w": r((cout, 2 * cout)), "gate_b": r((cout,)),
        "sc_w": r((cout, cin, 1, 1)),
        "sc_bn_g": ones(cout), "sc_bn_b": zeros(cout),
        "pr_w1": r((cout, cout, 1, 1)), "pr_b1": r((cout,)),
        "pr_bn_g": ones(cout), "pr_bn_b": zeros(cout),
        "pr_w2": r((cout, cout, 1, 1)), "pr_b2": r((cout,)),
        "conf_w": r((1, cout)), "conf_b": r((1,)),
    }


def _prep_params(p):
    """Glue: centre taps, torch (out,in)->(in,out) transposes, matmul fusion,
    bf16 weight cast, and packing of all small vectors/scalars into one f32 slab."""
    cout = p["conv1_w"].shape[0]
    bf = lambda a: jnp.asarray(a, jnp.float32).astype(jnp.bfloat16)
    row = lambda v: jnp.asarray(v, jnp.float32).reshape(1, -1)
    bc = lambda v: jnp.broadcast_to(jnp.asarray(v, jnp.float32).reshape(1, 1), (1, cout))

    w1 = p["conv1_w"][:, :, 1, 1].T              # (Cin, Cout) centre tap
    sc = p["sc_w"][:, :, 0, 0].T                 # (Cin, Cout) shortcut 1x1
    w1sc = bf(jnp.concatenate([w1, sc], axis=1))  # fused (Cin, 2*Cout)

    rows = [None] * N_ROWS
    rows[R_CONV1_B] = row(p["conv1_b"])
    rows[R_BN1_G] = row(p["bn1_g"]);   rows[R_BN1_B] = row(p["bn1_b"])
    rows[R_CONV2_B] = row(p["conv2_b"])
    rows[R_BN2_G] = row(p["bn2_g"]);   rows[R_BN2_B] = row(p["bn2_b"])
    rows[R_CTRL_B1] = row(p["ctrl_b1"]); rows[R_CTRL_B2] = row(p["ctrl_b2"])
    rows[R_GATE_B] = row(p["gate_b"])
    rows[R_SC_G] = row(p["sc_bn_g"]);  rows[R_SC_B] = row(p["sc_bn_b"])
    rows[R_PR_B1] = row(p["pr_b1"])
    rows[R_PR_G] = row(p["pr_bn_g"]);  rows[R_PR_BE] = row(p["pr_bn_b"])
    rows[R_PR_B2] = row(p["pr_b2"])
    rows[R_CONF_W] = row(p["conf_w"])             # Linear(Cout,1) weight as a row
    rows[R_SA_W_AVG] = bc(p["sa_w"][0, 0, 3, 3])  # 7x7 centre taps (avg / max channels)
    rows[R_SA_W_MAX] = bc(p["sa_w"][0, 1, 3, 3])
    rows[R_SA_B] = bc(p["sa_b"][0])
    rows[R_CONF_B] = bc(p["conf_b"][0])
    vec = jnp.concatenate(rows, axis=0)           # (N_ROWS, Cout) f32, one operand

    return (
        w1sc,
        bf(p["conv2_w"][:, :, 1, 1].T),
        bf(p["ca_w1"].T), bf(p["ca_w2"].T),
        bf(p["ctrl_w1"].T), bf(p["ctrl_w2"].T),
        bf(p["memory_keys"].T / np.sqrt(cout)),   # 1/sqrt(C) softmax scale folded in
        bf(p["memory"]),
        bf(p["gate_w"].T),                        # (2C, C): gate(concat([h, retrieved]))
        bf(p["pr_w1"][:, :, 0, 0].T), bf(p["pr_w2"][:, :, 0, 0].T),
        vec,
    )


def advanced_fractal_unit_forward(x_nchw, params):
    B, Cin, H, W = x_nchw.shape
    assert H == 1 and W == 1, "reference MemoryModule only type-checks at H=W=1"
    Cout = params["conv1_w"].shape[0]
    Mem = params["memory"].shape[0]
    x2d = x_nchw.reshape(B, Cin).astype(jnp.float32)
    prep = _prep_params(params)

    packed_width = pl.cdiv(2 * Cout + Mem + 1, 128) * 128   # lane-dense output slab
    vmem = lambda: pl.BlockSpec(memory_space=pltpu.MemorySpace.VMEM)
    packed = pl.pallas_call(
        _fractal_kernel,
        out_shape=jax.ShapeDtypeStruct((B, packed_width), jnp.float32),
        in_specs=[vmem() for _ in range(N_INPUTS)],
        out_specs=vmem(),
    )(x2d, *prep)

    out = packed[:, :Cout]
    spike = packed[:, Cout:2 * Cout]
    attn = packed[:, 2 * Cout:2 * Cout + Mem]
    conf = packed[:, 2 * Cout + Mem:2 * Cout + Mem + 1]
    metrics = {
        "memory_attention": attn.mean(),
        "spike_rate": spike.mean(),
        "prediction_confidence": conf.mean(),
    }
    return out.reshape(B, Cout, 1, 1), metrics


if __name__ == "__main__":
    B, CIN, COUT, H, W = 2, 4, 16, 1, 1
    key = jax.random.PRNGKey(0)
    kx, kp = jax.random.split(key)
    x = jax.random.normal(kx, (B, CIN, H, W), dtype=jnp.float32)
    params = init_params(kp, CIN, COUT)

    out, metrics = advanced_fractal_unit_forward(x, params)
    out = jax.block_until_ready(out)
    metrics = {k: float(v) for k, v in metrics.items()}

    # pure-JAX reference (same math, no Pallas) as a sanity check on the kernel
    prep = _prep_params(params)
    ref_out, ref_attn, ref_spike, ref_conf = _fractal_math(
        x.reshape(B, CIN).astype(jnp.float32), *prep, in_kernel=False)
    np.testing.assert_allclose(np.asarray(out).reshape(B, COUT),
                               np.asarray(ref_out), rtol=1e-2, atol=1e-2)
    assert np.isfinite(np.asarray(out)).all()
    assert all(np.isfinite(v) for v in metrics.values())
    print("KERNEL_OK")
</pallas_src>

<mosaic_0001>
module attributes {stable_mosaic.version = 11 : i64} {
  func.func @_fractal_kernel(%arg0: memref<2x4xf32, #tpu.memory_space<vmem>>, %arg1: memref<4x32xbf16, #tpu.memory_space<vmem>>, %arg2: memref<16x16xbf16, #tpu.memory_space<vmem>>, %arg3: memref<16x1xbf16, #tpu.memory_space<vmem>>, %arg4: memref<1x16xbf16, #tpu.memory_space<vmem>>, %arg5: memref<16x16xbf16, #tpu.memory_space<vmem>>, %arg6: memref<16x16xbf16, #tpu.memory_space<vmem>>, %arg7: memref<16x64xbf16, #tpu.memory_space<vmem>>, %arg8: memref<64x16xbf16, #tpu.memory_space<vmem>>, %arg9: memref<32x16xbf16, #tpu.memory_space<vmem>>, %arg10: memref<16x16xbf16, #tpu.memory_space<vmem>>, %arg11: memref<16x16xbf16, #tpu.memory_space<vmem>>, %arg12: memref<20x16xf32, #tpu.memory_space<vmem>>, %arg13: memref<2x128xf32, #tpu.memory_space<vmem>>) attributes {dimension_semantics = [], scalar_prefetch = 0 : i64, scratch_operands = 0 : i64, tpu.core_type = #tpu.core_type<tc>} {
    %c0 = arith.constant 0 : index
    %c0_0 = arith.constant 0 : index
    %0 = vector.load %arg0[%c0, %c0_0] : memref<2x4xf32, #tpu.memory_space<vmem>>, vector<2x4xf32>
    %c0_1 = arith.constant 0 : index
    %c0_2 = arith.constant 0 : index
    %1 = vector.load %arg1[%c0_1, %c0_2] : memref<4x32xbf16, #tpu.memory_space<vmem>>, vector<4x32xbf16>
    %c0_3 = arith.constant 0 : index
    %c0_4 = arith.constant 0 : index
    %2 = vector.load %arg2[%c0_3, %c0_4] : memref<16x16xbf16, #tpu.memory_space<vmem>>, vector<16x16xbf16>
    %c0_5 = arith.constant 0 : index
    %c0_6 = arith.constant 0 : index
    %3 = vector.load %arg3[%c0_5, %c0_6] : memref<16x1xbf16, #tpu.memory_space<vmem>>, vector<16x1xbf16>
    %c0_7 = arith.constant 0 : index
    %c0_8 = arith.constant 0 : index
    %4 = vector.load %arg4[%c0_7, %c0_8] : memref<1x16xbf16, #tpu.memory_space<vmem>>, vector<1x16xbf16>
    %c0_9 = arith.constant 0 : index
    %c0_10 = arith.constant 0 : index
    %5 = vector.load %arg5[%c0_9, %c0_10] : memref<16x16xbf16, #tpu.memory_space<vmem>>, vector<16x16xbf16>
    %c0_11 = arith.constant 0 : index
    %c0_12 = arith.constant 0 : index
    %6 = vector.load %arg6[%c0_11, %c0_12] : memref<16x16xbf16, #tpu.memory_space<vmem>>, vector<16x16xbf16>
    %c0_13 = arith.constant 0 : index
    %c0_14 = arith.constant 0 : index
    %7 = vector.load %arg7[%c0_13, %c0_14] : memref<16x64xbf16, #tpu.memory_space<vmem>>, vector<16x64xbf16>
    %c0_15 = arith.constant 0 : index
    %c0_16 = arith.constant 0 : index
    %8 = vector.load %arg8[%c0_15, %c0_16] : memref<64x16xbf16, #tpu.memory_space<vmem>>, vector<64x16xbf16>
    %c0_17 = arith.constant 0 : index
    %c0_18 = arith.constant 0 : index
    %9 = vector.load %arg9[%c0_17, %c0_18] : memref<32x16xbf16, #tpu.memory_space<vmem>>, vector<32x16xbf16>
    %c0_19 = arith.constant 0 : index
    %c0_20 = arith.constant 0 : index
    %10 = vector.load %arg10[%c0_19, %c0_20] : memref<16x16xbf16, #tpu.memory_space<vmem>>, vector<16x16xbf16>
    %c0_21 = arith.constant 0 : index
    %c0_22 = arith.constant 0 : index
    %11 = vector.load %arg11[%c0_21, %c0_22] : memref<16x16xbf16, #tpu.memory_space<vmem>>, vector<16x16xbf16>
    %c0_23 = arith.constant 0 : index
    %c0_24 = arith.constant 0 : index
    %12 = vector.load %arg12[%c0_23, %c0_24] : memref<20x16xf32, #tpu.memory_space<vmem>>, vector<20x16xf32>
    %13 = arith.truncf %0 : vector<2x4xf32> to vector<2x4xbf16>
    %cst = arith.constant dense<0.000000e+00> : vector<2x32xf32>
    %14 = tpu.matmul %13, %1, %cst {dimension_numbers = #tpu.dot_dimension_numbers<[1], [0], [0], [1], [0, 0, 1, 1], [], []>} : vector<2x4xbf16>, vector<4x32xbf16>, vector<2x32xf32> -> vector<2x32xf32>
    %15 = vector.extract_strided_slice %14 {offsets = [0, 0], sizes = [2, 16], strides = [1, 1]} : vector<2x32xf32> to vector<2x16xf32>
    %16 = vector.extract_strided_slice %12 {offsets = [0, 0], sizes = [1, 16], strides = [1, 1]} : vector<20x16xf32> to vector<1x16xf32>
    %17 = vector.broadcast %16 : vector<1x16xf32> to vector<2x16xf32>
    %18 = arith.addf %15, %17 : vector<2x16xf32>
    %19 = vector.extract_strided_slice %14 {offsets = [0, 16], sizes = [2, 16], strides = [1, 1]} : vector<2x32xf32> to vector<2x16xf32>
    %20 = vector.extract_strided_slice %12 {offsets = [9, 0], sizes = [1, 16], strides = [1, 1]} : vector<20x16xf32> to vector<1x16xf32>
    %21 = vector.extract_strided_slice %12 {offsets = [10, 0], sizes = [1, 16], strides = [1, 1]} : vector<20x16xf32> to vector<1x16xf32>
    %cst_25 = arith.constant dense<0.000000e+00> : vector<16xf32>
    %22 = vector.multi_reduction <add>, %19, %cst_25 [0] : vector<2x16xf32> to vector<16xf32>
    %23 = vector.shape_cast %22 : vector<16xf32> to vector<1x16xf32>
    %cst_26 = arith.constant 2.000000e+00 : f32
    %24 = vector.broadcast %cst_26 : f32 to vector<1x16xf32>
    %25 = arith.divf %23, %24 : vector<1x16xf32>
    %26 = vector.broadcast %25 : vector<1x16xf32> to vector<2x16xf32>
    %27 = arith.subf %19, %26 : vector<2x16xf32>
    %28 = arith.mulf %27, %27 : vector<2x16xf32>
    %cst_27 = arith.constant dense<0.000000e+00> : vector<16xf32>
    %29 = vector.multi_reduction <add>, %28, %cst_27 [0] : vector<2x16xf32> to vector<16xf32>
    %30 = vector.shape_cast %29 : vector<16xf32> to vector<1x16xf32>
    %cst_28 = arith.constant 2.000000e+00 : f32
    %31 = vector.broadcast %cst_28 : f32 to vector<1x16xf32>
    %32 = arith.divf %30, %31 : vector<1x16xf32>
    %33 = vector.broadcast %25 : vector<1x16xf32> to vector<2x16xf32>
    %34 = arith.subf %19, %33 : vector<2x16xf32>
    %cst_29 = arith.constant 9.99999974E-6 : f32
    %35 = vector.broadcast %cst_29 : f32 to vector<1x16xf32>
    %36 = arith.addf %32, %35 : vector<1x16xf32>
    %37 = math.rsqrt %36 : vector<1x16xf32>
    %38 = vector.broadcast %37 : vector<1x16xf32> to vector<2x16xf32>
    %39 = arith.mulf %34, %38 : vector<2x16xf32>
    %40 = vector.broadcast %20 : vector<1x16xf32> to vector<2x16xf32>
    %41 = arith.mulf %39, %40 : vector<2x16xf32>
    %42 = vector.broadcast %21 : vector<1x16xf32> to vector<2x16xf32>
    %43 = arith.addf %41, %42 : vector<2x16xf32>
    %44 = vector.extract_strided_slice %12 {offsets = [1, 0], sizes = [1, 16], strides = [1, 1]} : vector<20x16xf32> to vector<1x16xf32>
    %45 = vector.extract_strided_slice %12 {offsets = [2, 0], sizes = [1, 16], strides = [1, 1]} : vector<20x16xf32> to vector<1x16xf32>
    %cst_30 = arith.constant dense<0.000000e+00> : vector<16xf32>
    %46 = vector.multi_reduction <add>, %18, %cst_30 [0] : vector<2x16xf32> to vector<16xf32>
    %47 = vector.shape_cast %46 : vector<16xf32> to vector<1x16xf32>
    %cst_31 = arith.constant 2.000000e+00 : f32
    %48 = vector.broadcast %cst_31 : f32 to vector<1x16xf32>
    %49 = arith.divf %47, %48 : vector<1x16xf32>
    %50 = vector.broadcast %49 : vector<1x16xf32> to vector<2x16xf32>
    %51 = arith.subf %18, %50 : vector<2x16xf32>
    %52 = arith.mulf %51, %51 : vector<2x16xf32>
    %cst_32 = arith.constant dense<0.000000e+00> : vector<16xf32>
    %53 = vector.multi_reduction <add>, %52, %cst_32 [0] : vector<2x16xf32> to vector<16xf32>
    %54 = vector.shape_cast %53 : vector<16xf32> to vector<1x16xf32>
    %cst_33 = arith.constant 2.000000e+00 : f32
    %55 = vector.broadcast %cst_33 : f32 to vector<1x16xf32>
    %56 = arith.divf %54, %55 : vector<1x16xf32>
    %57 = vector.broadcast %49 : vector<1x16xf32> to vector<2x16xf32>
    %58 = arith.subf %18, %57 : vector<2x16xf32>
    %cst_34 = arith.constant 9.99999974E-6 : f32
    %59 = vector.broadcast %cst_34 : f32 to vector<1x16xf32>
    %60 = arith.addf %56, %59 : vector<1x16xf32>
    %61 = math.rsqrt %60 : vector<1x16xf32>
    %62 = vector.broadcast %61 : vector<1x16xf32> to vector<2x16xf32>
    %63 = arith.mulf %58, %62 : vector<2x16xf32>
    %64 = vector.broadcast %44 : vector<1x16xf32> to vector<2x16xf32>
    %65 = arith.mulf %63, %64 : vector<2x16xf32>
    %66 = vector.broadcast %45 : vector<1x16xf32> to vector<2x16xf32>
    %67 = arith.addf %65, %66 : vector<2x16xf32>
    %cst_35 = arith.constant 0.000000e+00 : f32
    %68 = vector.broadcast %cst_35 : f32 to vector<2x16xf32>
    %69 = arith.maximumf %67, %68 : vector<2x16xf32>
    %70 = arith.truncf %69 : vector<2x16xf32> to vector<2x16xbf16>
    %cst_36 = arith.constant dense<0.000000e+00> : vector<2x16xf32>
    %71 = tpu.matmul %70, %2, %cst_36 {dimension_numbers = #tpu.dot_dimension_numbers<[1], [0], [0], [1], [0, 0, 1, 1], [], []>} : vector<2x16xbf16>, vector<16x16xbf16>, vector<2x16xf32> -> vector<2x16xf32>
    %72 = vector.extract_strided_slice %12 {offsets = [3, 0], sizes = [1, 16], strides = [1, 1]} : vector<20x16xf32> to vector<1x16xf32>
    %73 = vector.broadcast %72 : vector<1x16xf32> to vector<2x16xf32>
    %74 = arith.addf %71, %73 : vector<2x16xf32>
    %75 = vector.extract_strided_slice %12 {offsets = [4, 0], sizes = [1, 16], strides = [1, 1]} : vector<20x16xf32> to vector<1x16xf32>
    %76 = vector.extract_strided_slice %12 {offsets = [5, 0], sizes = [1, 16], strides = [1, 1]} : vector<20x16xf32> to vector<1x16xf32>
    %cst_37 = arith.constant dense<0.000000e+00> : vector<16xf32>
    %77 = vector.multi_reduction <add>, %74, %cst_37 [0] : vector<2x16xf32> to vector<16xf32>
    %78 = vector.shape_cast %77 : vector<16xf32> to vector<1x16xf32>
    %cst_38 = arith.constant 2.000000e+00 : f32
    %79 = vector.broadcast %cst_38 : f32 to vector<1x16xf32>
    %80 = arith.divf %78, %79 : vector<1x16xf32>
    %81 = vector.broadcast %80 : vector<1x16xf32> to vector<2x16xf32>
    %82 = arith.subf %74, %81 : vector<2x16xf32>
    %83 = arith.mulf %82, %82 : vector<2x16xf32>
    %cst_39 = arith.constant dense<0.000000e+00> : vector<16xf32>
    %84 = vector.multi_reduction <add>, %83, %cst_39 [0] : vector<2x16xf32> to vector<16xf32>
    %85 = vector.shape_cast %84 : vector<16xf32> to vector<1x16xf32>
    %cst_40 = arith.constant 2.000000e+00 : f32
    %86 = vector.broadcast %cst_40 : f32 to vector<1x16xf32>
    %87 = arith.divf %85, %86 : vector<1x16xf32>
    %88 = vector.broadcast %80 : vector<1x16xf32> to vector<2x16xf32>
    %89 = arith.subf %74, %88 : vector<2x16xf32>
    %cst_41 = arith.constant 9.99999974E-6 : f32
    %90 = vector.broadcast %cst_41 : f32 to vector<1x16xf32>
    %91 = arith.addf %87, %90 : vector<1x16xf32>
    %92 = math.rsqrt %91 : vector<1x16xf32>
    %93 = vector.broadcast %92 : vector<1x16xf32> to vector<2x16xf32>
    %94 = arith.mulf %89, %93 : vector<2x16xf32>
    %95 = vector.broadcast %75 : vector<1x16xf32> to vector<2x16xf32>
    %96 = arith.mulf %94, %95 : vector<2x16xf32>
    %97 = vector.broadcast %76 : vector<1x16xf32> to vector<2x16xf32>
    %98 = arith.addf %96, %97 : vector<2x16xf32>
    %99 = arith.truncf %98 : vector<2x16xf32> to vector<2x16xbf16>
    %cst_42 = arith.constant dense<0.000000e+00> : vector<2x1xf32>
    %100 = tpu.matmul %99, %3, %cst_42 {dimension_numbers = #tpu.dot_dimension_numbers<[1], [0], [0], [1], [0, 0, 1, 1], [], []>} : vector<2x16xbf16>, vector<16x1xbf16>, vector<2x1xf32> -> vector<2x1xf32>
    %cst_43 = arith.constant 0.000000e+00 : f32
    %101 = vector.broadcast %cst_43 : f32 to vector<2x1xf32>
    %102 = arith.maximumf %100, %101 : vector<2x1xf32>
    %103 = arith.truncf %102 : vector<2x1xf32> to vector<2x1xbf16>
    %cst_44 = arith.constant dense<0.000000e+00> : vector<2x16xf32>
    %104 = tpu.matmul %103, %4, %cst_44 {dimension_numbers = #tpu.dot_dimension_numbers<[1], [0], [0], [1], [0, 0, 1, 1], [], []>} : vector<2x1xbf16>, vector<1x16xbf16>, vector<2x16xf32> -> vector<2x16xf32>
    %cst_45 = arith.constant 2.000000e+00 : f32
    %105 = vector.broadcast %cst_45 : f32 to vector<2x16xf32>
    %106 = arith.mulf %105, %104 : vector<2x16xf32>
    %107 = arith.negf %106 : vector<2x16xf32>
    %108 = math.exp %107 : vector<2x16xf32>
    %cst_46 = arith.constant 1.000000e+00 : f32
    %109 = vector.broadcast %cst_46 : f32 to vector<2x16xf32>
    %110 = arith.addf %109, %108 : vector<2x16xf32>
    %111 = arith.divf %109, %110 : vector<2x16xf32>
    %112 = arith.mulf %98, %111 : vector<2x16xf32>
    %cst_47 = arith.constant dense<0.000000e+00> : vector<2xf32>
    %113 = vector.multi_reduction <add>, %112, %cst_47 [1] : vector<2x16xf32> to vector<2xf32>
    %114 = vector.shape_cast %113 : vector<2xf32> to vector<2x1xf32>
    %cst_48 = arith.constant 1.600000e+01 : f32
    %115 = vector.broadcast %cst_48 : f32 to vector<2x1xf32>
    %116 = arith.divf %114, %115 : vector<2x1xf32>
    %cst_49 = arith.constant dense<0xFF800000> : vector<2xf32>
    %117 = vector.multi_reduction <maximumf>, %112, %cst_49 [1] : vector<2x16xf32> to vector<2xf32>
    %118 = vector.shape_cast %117 : vector<2xf32> to vector<2x1xf32>
    %119 = vector.extract_strided_slice %12 {offsets = [16, 0], sizes = [1, 1], strides = [1, 1]} : vector<20x16xf32> to vector<1x1xf32>
    %120 = vector.broadcast %119 : vector<1x1xf32> to vector<2x1xf32>
    %121 = arith.mulf %116, %120 : vector<2x1xf32>
    %122 = vector.extract_strided_slice %12 {offsets = [17, 0], sizes = [1, 1], strides = [1, 1]} : vector<20x16xf32> to vector<1x1xf32>
    %123 = vector.broadcast %122 : vector<1x1xf32> to vector<2x1xf32>
    %124 = arith.mulf %118, %123 : vector<2x1xf32>
    %125 = arith.addf %121, %124 : vector<2x1xf32>
    %126 = vector.extract_strided_slice %12 {offsets = [18, 0], sizes = [1, 1], strides = [1, 1]} : vector<20x16xf32> to vector<1x1xf32>
    %127 = vector.broadcast %126 : vector<1x1xf32> to vector<2x1xf32>
    %128 = arith.addf %125, %127 : vector<2x1xf32>
    %129 = arith.negf %128 : vector<2x1xf32>
    %130 = math.exp %129 : vector<2x1xf32>
    %cst_50 = arith.constant 1.000000e+00 : f32
    %131 = vector.broadcast %cst_50 : f32 to vector<2x1xf32>
    %132 = arith.addf %131, %130 : vector<2x1xf32>
    %133 = arith.divf %131, %132 : vector<2x1xf32>
    %134 = vector.broadcast %133 : vector<2x1xf32> to vector<2x16xf32>
    %135 = arith.mulf %112, %134 : vector<2x16xf32>
    %136 = arith.truncf %135 : vector<2x16xf32> to vector<2x16xbf16>
    %cst_51 = arith.constant dense<0.000000e+00> : vector<2x16xf32>
    %137 = tpu.matmul %136, %5, %cst_51 {dimension_numbers = #tpu.dot_dimension_numbers<[1], [0], [0], [1], [0, 0, 1, 1], [], []>} : vector<2x16xbf16>, vector<16x16xbf16>, vector<2x16xf32> -> vector<2x16xf32>
    %138 = vector.extract_strided_slice %12 {offsets = [6, 0], sizes = [1, 16], strides = [1, 1]} : vector<20x16xf32> to vector<1x16xf32>
    %139 = vector.broadcast %138 : vector<1x16xf32> to vector<2x16xf32>
    %140 = arith.addf %137, %139 : vector<2x16xf32>
    %cst_52 = arith.constant 0.000000e+00 : f32
    %141 = vector.broadcast %cst_52 : f32 to vector<2x16xf32>
    %142 = arith.maximumf %140, %141 : vector<2x16xf32>
    %143 = arith.truncf %142 : vector<2x16xf32> to vector<2x16xbf16>
    %cst_53 = arith.constant dense<0.000000e+00> : vector<2x16xf32>
    %144 = tpu.matmul %143, %6, %cst_53 {dimension_numbers = #tpu.dot_dimension_numbers<[1], [0], [0], [1], [0, 0, 1, 1], [], []>} : vector<2x16xbf16>, vector<16x16xbf16>, vector<2x16xf32> -> vector<2x16xf32>
    %145 = vector.extract_strided_slice %12 {offsets = [7, 0], sizes = [1, 16], strides = [1, 1]} : vector<20x16xf32> to vector<1x16xf32>
    %146 = vector.broadcast %145 : vector<1x16xf32> to vector<2x16xf32>
    %147 = arith.addf %144, %146 : vector<2x16xf32>
    %148 = arith.truncf %147 : vector<2x16xf32> to vector<2x16xbf16>
    %cst_54 = arith.constant dense<0.000000e+00> : vector<2x64xf32>
    %149 = tpu.matmul %148, %7, %cst_54 {dimension_numbers = #tpu.dot_dimension_numbers<[1], [0], [0], [1], [0, 0, 1, 1], [], []>} : vector<2x16xbf16>, vector<16x64xbf16>, vector<2x64xf32> -> vector<2x64xf32>
    %cst_55 = arith.constant dense<0xFF800000> : vector<2xf32>
    %150 = vector.multi_reduction <maximumf>, %149, %cst_55 [1] : vector<2x64xf32> to vector<2xf32>
    %151 = vector.shape_cast %150 : vector<2xf32> to vector<2x1xf32>
    %152 = vector.broadcast %151 : vector<2x1xf32> to vector<2x64xf32>
    %153 = arith.subf %149, %152 : vector<2x64xf32>
    %154 = math.exp %153 : vector<2x64xf32>
    %cst_56 = arith.constant dense<0.000000e+00> : vector<2xf32>
    %155 = vector.multi_reduction <add>, %154, %cst_56 [1] : vector<2x64xf32> to vector<2xf32>
    %156 = vector.shape_cast %155 : vector<2xf32> to vector<2x1xf32>
    %157 = tpu.reciprocal %156 {approx = true} : vector<2x1xf32> -> vector<2x1xf32>
    %158 = vector.broadcast %157 : vector<2x1xf32> to vector<2x64xf32>
    %159 = arith.mulf %154, %158 : vector<2x64xf32>
    %160 = arith.truncf %159 : vector<2x64xf32> to vector<2x64xbf16>
    %cst_57 = arith.constant dense<0.000000e+00> : vector<2x16xf32>
    %161 = tpu.matmul %160, %8, %cst_57 {dimension_numbers = #tpu.dot_dimension_numbers<[1], [0], [0], [1], [0, 0, 1, 1], [], []>} : vector<2x64xbf16>, vector<64x16xbf16>, vector<2x16xf32> -> vector<2x16xf32>
    %162 = tpu.concatenate %135, %161 in 1 : vector<2x16xf32>, vector<2x16xf32> -> vector<2x32xf32>
    %163 = arith.truncf %162 : vector<2x32xf32> to vector<2x32xbf16>
    %cst_58 = arith.constant dense<0.000000e+00> : vector<2x16xf32>
    %164 = tpu.matmul %163, %9, %cst_58 {dimension_numbers = #tpu.dot_dimension_numbers<[1], [0], [0], [1], [0, 0, 1, 1], [], []>} : vector<2x32xbf16>, vector<32x16xbf16>, vector<2x16xf32> -> vector<2x16xf32>
    %165 = vector.extract_strided_slice %12 {offsets = [8, 0], sizes = [1, 16], strides = [1, 1]} : vector<20x16xf32> to vector<1x16xf32>
    %166 = vector.broadcast %165 : vector<1x16xf32> to vector<2x16xf32>
    %167 = arith.addf %164, %166 : vector<2x16xf32>
    %168 = arith.negf %167 : vector<2x16xf32>
    %169 = math.exp %168 : vector<2x16xf32>
    %cst_59 = arith.constant 1.000000e+00 : f32
    %170 = vector.broadcast %cst_59 : f32 to vector<2x16xf32>
    %171 = arith.addf %170, %169 : vector<2x16xf32>
    %172 = arith.divf %170, %171 : vector<2x16xf32>
    %173 = arith.mulf %172, %161 : vector<2x16xf32>
    %cst_60 = arith.constant 1.000000e+00 : f32
    %174 = vector.broadcast %cst_60 : f32 to vector<2x16xf32>
    %175 = arith.subf %174, %172 : vector<2x16xf32>
    %176 = arith.mulf %175, %135 : vector<2x16xf32>
    %177 = arith.addf %173, %176 : vector<2x16xf32>
    %cst_61 = arith.constant 1.000000e-01 : f32
    %178 = vector.broadcast %cst_61 : f32 to vector<2x16xf32>
    %179 = arith.mulf %178, %177 : vector<2x16xf32>
    %cst_62 = arith.constant 1.000000e+00 : f32
    %180 = vector.broadcast %cst_62 : f32 to vector<2x16xf32>
    %181 = arith.cmpf oge, %179, %180 : vector<2x16xf32>
    %182 = arith.extui %181 : vector<2x16xi1> to vector<2x16xi32>
    %183 = arith.sitofp %182 : vector<2x16xi32> to vector<2x16xf32>
    %184 = arith.truncf %183 : vector<2x16xf32> to vector<2x16xbf16>
    %cst_63 = arith.constant dense<0.000000e+00> : vector<2x16xf32>
    %185 = tpu.matmul %184, %10, %cst_63 {dimension_numbers = #tpu.dot_dimension_numbers<[1], [0], [0], [1], [0, 0, 1, 1], [], []>} : vector<2x16xbf16>, vector<16x16xbf16>, vector<2x16xf32> -> vector<2x16xf32>
    %186 = vector.extract_strided_slice %12 {offsets = [11, 0], sizes = [1, 16], strides = [1, 1]} : vector<20x16xf32> to vector<1x16xf32>
    %187 = vector.broadcast %186 : vector<1x16xf32> to vector<2x16xf32>
    %188 = arith.addf %185, %187 : vector<2x16xf32>
    %189 = vector.extract_strided_slice %12 {offsets = [12, 0], sizes = [1, 16], strides = [1, 1]} : vector<20x16xf32> to vector<1x16xf32>
    %190 = vector.extract_strided_slice %12 {offsets = [13, 0], sizes = [1, 16], strides = [1, 1]} : vector<20x16xf32> to vector<1x16xf32>
    %cst_64 = arith.constant dense<0.000000e+00> : vector<16xf32>
    %191 = vector.multi_reduction <add>, %188, %cst_64 [0] : vector<2x16xf32> to vector<16xf32>
    %192 = vector.shape_cast %191 : vector<16xf32> to vector<1x16xf32>
    %cst_65 = arith.constant 2.000000e+00 : f32
    %193 = vector.broadcast %cst_65 : f32 to vector<1x16xf32>
    %194 = arith.divf %192, %193 : vector<1x16xf32>
    %195 = vector.broadcast %194 : vector<1x16xf32> to vector<2x16xf32>
    %196 = arith.subf %188, %195 : vector<2x16xf32>
    %197 = arith.mulf %196, %196 : vector<2x16xf32>
    %cst_66 = arith.constant dense<0.000000e+00> : vector<16xf32>
    %198 = vector.multi_reduction <add>, %197, %cst_66 [0] : vector<2x16xf32> to vector<16xf32>
    %199 = vector.shape_cast %198 : vector<16xf32> to vector<1x16xf32>
    %cst_67 = arith.constant 2.000000e+00 : f32
    %200 = vector.broadcast %cst_67 : f32 to vector<1x16xf32>
    %201 = arith.divf %199, %200 : vector<1x16xf32>
    %202 = vector.broadcast %194 : vector<1x16xf32> to vector<2x16xf32>
    %203 = arith.subf %188, %202 : vector<2x16xf32>
    %cst_68 = arith.constant 9.99999974E-6 : f32
    %204 = vector.broadcast %cst_68 : f32 to vector<1x16xf32>
    %205 = arith.addf %201, %204 : vector<1x16xf32>
    %206 = math.rsqrt %205 : vector<1x16xf32>
    %207 = vector.broadcast %206 : vector<1x16xf32> to vector<2x16xf32>
    %208 = arith.mulf %203, %207 : vector<2x16xf32>
    %209 = vector.broadcast %189 : vector<1x16xf32> to vector<2x16xf32>
    %210 = arith.mulf %208, %209 : vector<2x16xf32>
    %211 = vector.broadcast %190 : vector<1x16xf32> to vector<2x16xf32>
    %212 = arith.addf %210, %211 : vector<2x16xf32>
    %cst_69 = arith.constant 0.000000e+00 : f32
    %213 = vector.broadcast %cst_69 : f32 to vector<2x16xf32>
    %214 = arith.maximumf %212, %213 : vector<2x16xf32>
    %215 = arith.truncf %214 : vector<2x16xf32> to vector<2x16xbf16>
    %cst_70 = arith.constant dense<0.000000e+00> : vector<2x16xf32>
    %216 = tpu.matmul %215, %11, %cst_70 {dimension_numbers = #tpu.dot_dimension_numbers<[1], [0], [0], [1], [0, 0, 1, 1], [], []>} : vector<2x16xbf16>, vector<16x16xbf16>, vector<2x16xf32> -> vector<2x16xf32>
    %217 = vector.extract_strided_slice %12 {offsets = [14, 0], sizes = [1, 16], strides = [1, 1]} : vector<20x16xf32> to vector<1x16xf32>
    %218 = vector.broadcast %217 : vector<1x16xf32> to vector<2x16xf32>
    %219 = arith.addf %216, %218 : vector<2x16xf32>
    %220 = vector.extract_strided_slice %12 {offsets = [15, 0], sizes = [1, 16], strides = [1, 1]} : vector<20x16xf32> to vector<1x16xf32>
    %221 = vector.broadcast %220 : vector<1x16xf32> to vector<2x16xf32>
    %222 = arith.mulf %219, %221 : vector<2x16xf32>
    %cst_71 = arith.constant dense<0.000000e+00> : vector<2xf32>
    %223 = vector.multi_reduction <add>, %222, %cst_71 [1] : vector<2x16xf32> to vector<2xf32>
    %224 = vector.shape_cast %223 : vector<2xf32> to vector<2x1xf32>
    %225 = vector.extract_strided_slice %12 {offsets = [19, 0], sizes = [1, 1], strides = [1, 1]} : vector<20x16xf32> to vector<1x1xf32>
    %226 = vector.broadcast %225 : vector<1x1xf32> to vector<2x1xf32>
    %227 = arith.addf %224, %226 : vector<2x1xf32>
    %228 = arith.negf %227 : vector<2x1xf32>
    %229 = math.exp %228 : vector<2x1xf32>
    %cst_72 = arith.constant 1.000000e+00 : f32
    %230 = vector.broadcast %cst_72 : f32 to vector<2x1xf32>
    %231 = arith.addf %230, %229 : vector<2x1xf32>
    %232 = arith.divf %230, %231 : vector<2x1xf32>
    %233 = arith.addf %183, %43 : vector<2x16xf32>
    %cst_73 = arith.constant 0.000000e+00 : f32
    %234 = vector.broadcast %cst_73 : f32 to vector<2x16xf32>
    %235 = arith.maximumf %233, %234 : vector<2x16xf32>
    %cst_74 = arith.constant 0.000000e+00 : f32
    %236 = vector.broadcast %cst_74 : f32 to vector<2x128xf32>
    %c0_75 = arith.constant 0 : index
    %c0_76 = arith.constant 0 : index
    %237 = vector.load %arg13[%c0_75, %c0_76] : memref<2x128xf32, #tpu.memory_space<vmem>>, vector<2x128xf32>
    tpu.vector_store %arg13[%c0_75, %c0_76], %236 {strides = array<i32>} : memref<2x128xf32, #tpu.memory_space<vmem>>, vector<2x128xf32>,
    %c0_77 = arith.constant 0 : index
    %c0_78 = arith.constant 0 : index
    %238 = vector.load %arg13[%c0_77, %c0_78] : memref<2x128xf32, #tpu.memory_space<vmem>>, vector<2x16xf32>
    tpu.vector_store %arg13[%c0_77, %c0_78], %235 {strides = array<i32>} : memref<2x128xf32, #tpu.memory_space<vmem>>, vector<2x16xf32>,
    %c0_79 = arith.constant 0 : index
    %c16 = arith.constant 16 : index
    %239 = vector.load %arg13[%c0_79, %c16] : memref<2x128xf32, #tpu.memory_space<vmem>>, vector<2x16xf32>
    tpu.vector_store %arg13[%c0_79, %c16], %183 {strides = array<i32>} : memref<2x128xf32, #tpu.memory_space<vmem>>, vector<2x16xf32>,
    %c0_80 = arith.constant 0 : index
    %c32 = arith.constant 32 : index
    %240 = vector.load %arg13[%c0_80, %c32] : memref<2x128xf32, #tpu.memory_space<vmem>>, vector<2x64xf32>
    tpu.vector_store %arg13[%c0_80, %c32], %159 {strides = array<i32>} : memref<2x128xf32, #tpu.memory_space<vmem>>, vector<2x64xf32>,
    %c0_81 = arith.constant 0 : index
    %c96 = arith.constant 96 : index
    %241 = vector.load %arg13[%c0_81, %c96] : memref<2x128xf32, #tpu.memory_space<vmem>>, vector<2x1xf32>
    tpu.vector_store %arg13[%c0_81, %c96], %232 {strides = array<i32>} : memref<2x128xf32, #tpu.memory_space<vmem>>, vector<2x1xf32>,
    return
  }
}

</mosaic_0001>

<llo_original>
// kernel: tpu_custom_call.1
$region0: #{tpu_custom_call.1}
  #allocation0 [shape = 'u32[]', space=smem, size = 0x4, offset = 0x4, fixed_abs, tag = 'smem constant byte address 0x4 - core index']
  #allocation1 [shape = 'u32[144,128]{1,0:T(1,128)}', space=vmem, size = 0x12000, scoped, tag = 'internal scratch']
  %s0 = inlined_call_operand.vmem [shape: f32[2,4], index: 0, kind: input, shape index: {}]
  %s1 = inlined_call_operand.vmem [shape: bf16[4,32], index: 1, kind: input, shape index: {}]
  %s2 = inlined_call_operand.vmem [shape: bf16[16,16], index: 2, kind: input, shape index: {}]
  %s3 = inlined_call_operand.vmem [shape: bf16[16,1], index: 3, kind: input, shape index: {}]
  %s4 = inlined_call_operand.vmem [shape: bf16[1,16], index: 4, kind: input, shape index: {}]
  %s5 = inlined_call_operand.vmem [shape: bf16[16,16], index: 5, kind: input, shape index: {}]
  %s6 = inlined_call_operand.vmem [shape: bf16[16,16], index: 6, kind: input, shape index: {}]
  %s7 = inlined_call_operand.vmem [shape: bf16[16,64], index: 7, kind: input, shape index: {}]
  %s8 = inlined_call_operand.vmem [shape: bf16[64,16], index: 8, kind: input, shape index: {}]
  %s9 = inlined_call_operand.vmem [shape: bf16[32,16], index: 9, kind: input, shape index: {}]
  %s10 = inlined_call_operand.vmem [shape: bf16[16,16], index: 10, kind: input, shape index: {}]
  %s11 = inlined_call_operand.vmem [shape: bf16[16,16], index: 11, kind: input, shape index: {}]
  %s12 = inlined_call_operand.vmem [shape: f32[20,16], index: 12, kind: input, shape index: {}]
  %s13 = inlined_call_operand.hbm [shape: f32[2,128], index: 13, kind: output, shape index: {}]
  %s14 = sld [smem:[#allocation0]]
  $region62: #{tpu_custom_call.1} parent=0
    _
  %s16 = ssub.s32 1, %s14
  %s17 = scalar_select 0, %s16, %s14
  $region1: #{tpu_custom_call.1} parent=0
    #allocation2 [shape = 'u8[1024]{0}', space=vmem, size = 0x400, scoped, tag = 'output window, operand 0, single buffered']
    #allocation3 [shape = 's32[1]{0}', space=sflag, size = 0x4, scoped, tag = 'scoped memory for tpu_custom_call.1']
    %18 = vsyncpa [#allocation3], 0
    // Predicated region
    $region2: #{tpu_custom_call.1} parent=1 // pred_check
      _
    $region3: #{tpu_custom_call.1} parent=1 // pred_check_branch
      %20 = sbr.rel (0) target = $region5
    $region4: #{tpu_custom_call.1} parent=1 // pred_region
      _
    $region5: #{tpu_custom_call.1} parent=1 // pred_fallthru
      _
    // Predicated region
    $region6: #{tpu_custom_call.1} parent=1 // pred_check
      _
    $region7: #{tpu_custom_call.1} parent=1 // pred_check_branch
      %22 = sbr.rel (0) target = $region9
    $region8: #{tpu_custom_call.1} parent=1 // pred_region
      _
    $region9: #{tpu_custom_call.1} parent=1 // pred_fallthru
      _
    // Predicated region
    $region10: #{tpu_custom_call.1} parent=1 // pred_check
      _
    $region11: #{tpu_custom_call.1} parent=1 // pred_check_branch
      %24 = sbr.rel (0) target = $region13
    $region12: #{tpu_custom_call.1} parent=1 // pred_region
      _
    $region13: #{tpu_custom_call.1} parent=1 // pred_fallthru
      _
    // Predicated region
    $region14: #{tpu_custom_call.1} parent=1 // pred_check
      _
    $region15: #{tpu_custom_call.1} parent=1 // pred_check_branch
      %26 = sbr.rel (0) target = $region17
    $region16: #{tpu_custom_call.1} parent=1 // pred_region
      _
    $region17: #{tpu_custom_call.1} parent=1 // pred_fallthru
      _
    // Predicated region
    $region18: #{tpu_custom_call.1} parent=1 // pred_check
      _
    $region19: #{tpu_custom_call.1} parent=1 // pred_check_branch
      %28 = sbr.rel (0) target = $region21
    $region20: #{tpu_custom_call.1} parent=1 // pred_region
      _
    $region21: #{tpu_custom_call.1} parent=1 // pred_fallthru
      _
    // Predicated region
    $region22: #{tpu_custom_call.1} parent=1 // pred_check
      _
    $region23: #{tpu_custom_call.1} parent=1 // pred_check_branch
      %30 = sbr.rel (0) target = $region25
    $region24: #{tpu_custom_call.1} parent=1 // pred_region
      _
    $region25: #{tpu_custom_call.1} parent=1 // pred_fallthru
      _
    // Predicated region
    $region26: #{tpu_custom_call.1} parent=1 // pred_check
      _
    $region27: #{tpu_custom_call.1} parent=1 // pred_check_branch
      %32 = sbr.rel (0) target = $region29
    $region28: #{tpu_custom_call.1} parent=1 // pred_region
      _
    $region29: #{tpu_custom_call.1} parent=1 // pred_fallthru
      _
    // Predicated region
    $region30: #{tpu_custom_call.1} parent=1 // pred_check
      _
    $region31: #{tpu_custom_call.1} parent=1 // pred_check_branch
      %34 = sbr.rel (0) target = $region33
    $region32: #{tpu_custom_call.1} parent=1 // pred_region
      _
    $region33: #{tpu_custom_call.1} parent=1 // pred_fallthru
      _
    // Predicated region
    $region34: #{tpu_custom_call.1} parent=1 // pred_check
      _
    $region35: #{tpu_custom_call.1} parent=1 // pred_check_branch
      %36 = sbr.rel (0) target = $region37
    $region36: #{tpu_custom_call.1} parent=1 // pred_region
      _
    $region37: #{tpu_custom_call.1} parent=1 // pred_fallthru
      _
    // Predicated region
    $region38: #{tpu_custom_call.1} parent=1 // pred_check
      _
    $region39: #{tpu_custom_call.1} parent=1 // pred_check_branch
      %38 = sbr.rel (0) target = $region41
    $region40: #{tpu_custom_call.1} parent=1 // pred_region
      _
    $region41: #{tpu_custom_call.1} parent=1 // pred_fallthru
      _
    // Predicated region
    $region42: #{tpu_custom_call.1} parent=1 // pred_check
      _
    $region43: #{tpu_custom_call.1} parent=1 // pred_check_branch
      %40 = sbr.rel (0) target = $region45
    $region44: #{tpu_custom_call.1} parent=1 // pred_region
      _
    $region45: #{tpu_custom_call.1} parent=1 // pred_fallthru
      _
    // Predicated region
    $region46: #{tpu_custom_call.1} parent=1 // pred_check
      _
    $region47: #{tpu_custom_call.1} parent=1 // pred_check_branch
      %42 = sbr.rel (0) target = $region49
    $region48: #{tpu_custom_call.1} parent=1 // pred_region
      _
    $region49: #{tpu_custom_call.1} parent=1 // pred_fallthru
      _
    // Predicated region
    $region50: #{tpu_custom_call.1} parent=1 // pred_check
      _
    $region51: #{tpu_custom_call.1} parent=1 // pred_check_branch
      %44 = sbr.rel (0) target = $region53
    $region52: #{tpu_custom_call.1} parent=1 // pred_region
      _
    $region53: #{tpu_custom_call.1} parent=1 // pred_fallthru
      _
    %v46 = vld [vmem:[%s0] sm:$0x3]
    %v47 = vld [vmem:[%s1] sm:$0x3]
    %v48 = vld [vmem:[%s2] sm:$0xf]
    %v49 = vld [vmem:[%s2 + $0x4] sm:$0xf]
    %v50 = vld [vmem:[%s3] sm:$0xf]
    %v51 = vld [vmem:[%s3 + $0x4] sm:$0xf]
    %v52 = vld [vmem:[%s4] sm:$0x1]
    %v53 = vld [vmem:[%s5] sm:$0xf]
    %v54 = vld [vmem:[%s5 + $0x4] sm:$0xf]
    %v55 = vld [vmem:[%s6] sm:$0xf]
    %v56 = vld [vmem:[%s6 + $0x4] sm:$0xf]
    %v57 = vld [vmem:[%s7] sm:$0xf]
    %v58 = vld [vmem:[%s7 + $0x4] sm:$0xf]
    %v59 = vld [vmem:[%s8] sm:$0xf]
    %v60 = vld [vmem:[%s8 + $0x4] sm:$0xf]
    %v61 = vld [vmem:[%s8 + $0x8] sm:$0xf]
    %v62 = vld [vmem:[%s8 + $0xc] sm:$0xf]
    %v63 = vld [vmem:[%s8 + $0x10] sm:$0xf]
    %v64 = vld [vmem:[%s8 + $0x14] sm:$0xf]
    %v65 = vld [vmem:[%s8 + $0x18] sm:$0xf]
    %v66 = vld [vmem:[%s8 + $0x1c] sm:$0xf]
    %v67 = vld [vmem:[%s9] sm:$0xf]
    %v68 = vld [vmem:[%s9 + $0x4] sm:$0xf]
    %v69 = vld [vmem:[%s9 + $0x8] sm:$0xf]
    %v70 = vld [vmem:[%s9 + $0xc] sm:$0xf]
    %v71 = vld [vmem:[%s10] sm:$0xf]
    %v72 = vld [vmem:[%s10 + $0x4] sm:$0xf]
    %v73 = vld [vmem:[%s11] sm:$0xf]
    %v74 = vld [vmem:[%s11 + $0x4] sm:$0xf]
    %v75 = vld [vmem:[%s12] sm:$0xff]
    %v76 = vld [vmem:[%s12 + $0x8] sm:$0xff]
    %v77 = vld [vmem:[%s12 + $0x10] sm:$0xf]
    %v78 = vpack.c.bf16 %v46, %v46
    %vm79 = vcmask 31744
    %v81 = vsel %vm79, %v78, 0
    %vm83 = vcmask 1041408
    %v85 = vsel %vm83, %v47, 0
    %87 = vmatprep.subr.bf16.mxu0 0
    %88 = vmatpush1.bf16.msra.mxu0 %v85
    %89 = vmatprep.subr.bf16.mxu0 0
    %90 = vmatpush1.bf16.msra.mxu0 0
    %91 = vmatprep.subr.bf16.mxu0 0
    %92 = vmatpush1.bf16.msra.mxu0 0
    %93 = vmatprep.subr.bf16.mxu0 0
    %94 = vmatpush1.bf16.msra.mxu0 0
    %95 = vmatprep.subr.bf16.mxu0 0
    %96 = vmatpush1.bf16.msra.mxu0 0
    %97 = vmatprep.subr.bf16.mxu0 0
    %98 = vmatpush1.bf16.msra.mxu0 0
    %99 = vmatprep.subr.bf16.mxu0 0
    %100 = vmatpush1.bf16.msra.mxu0 0
    %101 = vmatprep.subr.bf16.mxu0 0
    %102 = vmatpush1.bf16.msra.mxu0 0
    %103 = vmatprep.subr.bf16.mxu0 0
    %104 = vmatpush1.bf16.msra.mxu0 0
    %105 = vmatprep.subr.bf16.mxu0 0
    %106 = vmatpush1.bf16.msra.mxu0 0
    %107 = vmatprep.subr.bf16.mxu0 0
    %108 = vmatpush1.bf16.msra.mxu0 0
    %109 = vmatprep.subr.bf16.mxu0 0
    %110 = vmatpush1.bf16.msra.mxu0 0
    %111 = vmatprep.subr.bf16.mxu0 0
    %112 = vmatpush1.bf16.msra.mxu0 0
    %113 = vmatprep.subr.bf16.mxu0 0
    %114 = vmatpush1.bf16.msra.mxu0 0
    %115 = vmatprep.subr.bf16.mxu0 0
    %116 = vmatpush1.bf16.msra.mxu0 0
    %117 = vmatprep.subr.bf16.mxu0 0
    %118 = vmatpush1.bf16.msra.mxu0 0
    %119 = vmatprep.mubr.bf16.mxu0 0
    %120 = vmatmul.mubr.bf16.gmra.mrb[0].mxu0 %v81
    %v121 = vpop.f32.mrb[0].mxu0
    %v122 = vadd.f32 0.0, %v121
    %v123 = vpop.f32.mrb[0].mxu0
    %v124 = vpop.f32.mrb[0].mxu0
    %v125 = vpop.f32.mrb[0].mxu0
    %126 = vdwg.mxu0
    %v127 = vlaneseq
    %v128 = vshrl.u32 %v127, 7
    %v129 = vsub.s32 0, %v128
    %v130 = vrot.slane %v75, %v129
    %v131 = vadd.f32 %v122, %v130
    %vm132 = vcmask 255104
    %v133 = vsel %vm132, %v122, 0.0
    %v134 = vrot.slane %v133, 4
    %v135 = vadd.f32 %v133, %v134
    %v136 = vrot.slane %v135, 2
    %v137 = vadd.f32 %v135, %v136
    %v138 = vrot.slane %v137, 1
    %v139 = vadd.f32 %v137, %v138
    %v140 = vrcp.pop 2.0
    %v141 = vmul.f32 %v139, %v140
    %v142 = vsub.f32 %v122, %v141
    %v143 = vmul.f32 %v142, %v142
    %v144 = vsel %vm132, %v143, 0.0
    %v145 = vrot.slane %v144, 4
    %v146 = vadd.f32 %v144, %v145
    %v147 = vrot.slane %v146, 2
    %v148 = vadd.f32 %v146, %v147
    %v149 = vrot.slane %v148, 1
    %v150 = vadd.f32 %v148, %v149
    %v151 = vmul.f32 %v150, %v140
    %v152 = vadd.f32 %v151, 1e-05
    %v153 = vrsqrt.pop %v152
    %v154 = vmul.f32 %v142, %v153
    %v155 = vlaneseq
    %v156 = vshrl.u32 %v155, 7
    %v157 = vsub.s32 1, %v156
    %v158 = vrot.slane %v76, %v157
    %160 = vrot.lane.b32.xlu0 %v158, 16
    %v161 = vpop.permute.xlu0 %160
    %v163 = vmul.f32 %v154, %v161
    %v164 = vlaneseq
    %v165 = vshrl.u32 %v164, 7
    %v166 = vsub.s32 2, %v165
    %v167 = vrot.slane %v76, %v166
    %169 = vrot.lane.b32.xlu0 %v167, 16
    %v170 = vpop.permute.xlu0 %169
    %v172 = vadd.f32 %v163, %v170
    %vm173 = vcmask 123904
    %v174 = vsel %vm173, %v131, 0.0
    %v175 = vrot.slane %v174, 4
    %v176 = vadd.f32 %v174, %v175
    %v177 = vrot.slane %v176, 2
    %v178 = vadd.f32 %v176, %v177
    %v179 = vrot.slane %v178, 1
    %v180 = vadd.f32 %v178, %v179
    %v181 = vmul.f32 %v180, %v140
    %v182 = vsub.f32 %v131, %v181
    %v183 = vmul.f32 %v182, %v182
    %v184 = vsel %vm173, %v183, 0.0
    %v185 = vrot.slane %v184, 4
    %v186 = vadd.f32 %v184, %v185
    %v187 = vrot.slane %v186, 2
    %v188 = vadd.f32 %v186, %v187
    %v189 = vrot.slane %v188, 1
    %v190 = vadd.f32 %v188, %v189
    %v191 = vmul.f32 %v190, %v140
    %v192 = vadd.f32 %v191, 1e-05
    %v193 = vrsqrt.pop %v192
    %v194 = vmul.f32 %v182, %v193
    %v195 = vlaneseq
    %v196 = vshrl.u32 %v195, 7
    %v197 = vsub.s32 1, %v196
    %v198 = vrot.slane %v75, %v197
    %v199 = vmul.f32 %v194, %v198
    %v200 = vlaneseq
    %v201 = vshrl.u32 %v200, 7
    %v202 = vsub.s32 2, %v201
    %v203 = vrot.slane %v75, %v202
    %v204 = vadd.f32 %v199, %v203
    %v205 = vmax.f32 %v204, 0.0
    %v206 = vpack.c.bf16 %v205, %v205
    %v207 = vlaneseq
    %v208 = vshrl.u32 %v207, 7
    %v209 = vsub.s32 3, %v208
    %v210 = vrot.slane %v75, %v209
    %v213 = vunpack.c.l.b16 %v48
    %v214 = vunpack.c.l.b16 %v49
    %v215 = vpack.c.b16 %v214, %v213
    %vm217 = vcmask 130048
    %v219 = vsel %vm217, %v206, 0
    %221 = vmatprep.subr.bf16.mxu0 0
    %222 = vmatpush1.bf16.msra.mxu0 %v215
    %223 = vmatprep.subr.bf16.mxu0 0
    %224 = vmatpush1.bf16.msra.mxu0 0
    %225 = vmatprep.subr.bf16.mxu0 0
    %226 = vmatpush1.bf16.msra.mxu0 0
    %227 = vmatprep.subr.bf16.mxu0 0
    %228 = vmatpush1.bf16.msra.mxu0 0
    %229 = vmatprep.subr.bf16.mxu0 0
    %230 = vmatpush1.bf16.msra.mxu0 0
    %231 = vmatprep.subr.bf16.mxu0 0
    %232 = vmatpush1.bf16.msra.mxu0 0
    %233 = vmatprep.subr.bf16.mxu0 0
    %234 = vmatpush1.bf16.msra.mxu0 0
    %235 = vmatprep.subr.bf16.mxu0 0
    %236 = vmatpush1.bf16.msra.mxu0 0
    %237 = vmatprep.subr.bf16.mxu0 0
    %238 = vmatpush1.bf16.msra.mxu0 0
    %239 = vmatprep.subr.bf16.mxu0 0
    %240 = vmatpush1.bf16.msra.mxu0 0
    %241 = vmatprep.subr.bf16.mxu0 0
    %242 = vmatpush1.bf16.msra.mxu0 0
    %243 = vmatprep.subr.bf16.mxu0 0
    %244 = vmatpush1.bf16.msra.mxu0 0
    %245 = vmatprep.subr.bf16.mxu0 0
    %246 = vmatpush1.bf16.msra.mxu0 0
    %247 = vmatprep.subr.bf16.mxu0 0
    %248 = vmatpush1.bf16.msra.mxu0 0
    %249 = vmatprep.subr.bf16.mxu0 0
    %250 = vmatpush1.bf16.msra.mxu0 0
    %251 = vmatprep.subr.bf16.mxu0 0
    %252 = vmatpush1.bf16.msra.mxu0 0
    %253 = vmatprep.mubr.bf16.mxu0 0
    %254 = vmatmul.mubr.bf16.gmra.mrb[0].mxu0 %v219
    %v255 = vpop.f32.mrb[0].mxu0
    %v256 = vadd.f32 %v210, %v255
    %v257 = vpop.f32.mrb[0].mxu0
    %v258 = vpop.f32.mrb[0].mxu0
    %v259 = vpop.f32.mrb[0].mxu0
    %260 = vdwg.mxu0
    %v261 = vsel %vm173, %v256, 0.0
    %v262 = vrot.slane %v261, 4
    %v263 = vadd.f32 %v261, %v262
    %v264 = vrot.slane %v263, 2
    %v265 = vadd.f32 %v263, %v264
    %v266 = vrot.slane %v265, 1
    %v267 = vadd.f32 %v265, %v266
    %v268 = vmul.f32 %v267, %v140
    %v269 = vsub.f32 %v256, %v268
    %v270 = vmul.f32 %v269, %v269
    %v271 = vsel %vm173, %v270, 0.0
    %v272 = vrot.slane %v271, 4
    %v273 = vadd.f32 %v271, %v272
    %v274 = vrot.slane %v273, 2
    %v275 = vadd.f32 %v273, %v274
    %v276 = vrot.slane %v275, 1
    %v277 = vadd.f32 %v275, %v276
    %v278 = vmul.f32 %v277, %v140
    %v279 = vadd.f32 %v278, 1e-05
    %v280 = vrsqrt.pop %v279
    %v281 = vmul.f32 %v269, %v280
    %v282 = vlaneseq
    %v283 = vshrl.u32 %v282, 7
    %v284 = vsub.s32 4, %v283
    %v285 = vrot.slane %v75, %v284
    %v286 = vmul.f32 %v281, %v285
    %v287 = vlaneseq
    %v288 = vshrl.u32 %v287, 7
    %v289 = vsub.s32 5, %v288
    %v290 = vrot.slane %v75, %v289
    %v291 = vadd.f32 %v286, %v290
    %v292 = vpack.c.bf16 %v291, %v291
    %v295 = vunpack.c.l.b16 %v50
    %v296 = vunpack.c.l.b16 %v51
    %v297 = vpack.c.b16 %v296, %v295
    %v300 = vsel %vm217, %v292, 0
    %302 = vmatprep.subr.bf16.mxu0 0
    %303 = vmatpush1.bf16.msra.mxu0 %v297
    %304 = vmatprep.subr.bf16.mxu0 0
    %305 = vmatpush1.bf16.msra.mxu0 0
    %306 = vmatprep.subr.bf16.mxu0 0
    %307 = vmatpush1.bf16.msra.mxu0 0
    %308 = vmatprep.subr.bf16.mxu0 0
    %309 = vmatpush1.bf16.msra.mxu0 0
    %310 = vmatprep.subr.bf16.mxu0 0
    %311 = vmatpush1.bf16.msra.mxu0 0
    %312 = vmatprep.subr.bf16.mxu0 0
    %313 = vmatpush1.bf16.msra.mxu0 0
    %314 = vmatprep.subr.bf16.mxu0 0
    %315 = vmatpush1.bf16.msra.mxu0 0
    %316 = vmatprep.subr.bf16.mxu0 0
    %317 = vmatpush1.bf16.msra.mxu0 0
    %318 = vmatprep.subr.bf16.mxu0 0
    %319 = vmatpush1.bf16.msra.mxu0 0
    %320 = vmatprep.subr.bf16.mxu0 0
    %321 = vmatpush1.bf16.msra.mxu0 0
    %322 = vmatprep.subr.bf16.mxu0 0
    %323 = vmatpush1.bf16.msra.mxu0 0
    %324 = vmatprep.subr.bf16.mxu0 0
    %325 = vmatpush1.bf16.msra.mxu0 0
    %326 = vmatprep.subr.bf16.mxu0 0
    %327 = vmatpush1.bf16.msra.mxu0 0
    %328 = vmatprep.subr.bf16.mxu0 0
    %329 = vmatpush1.bf16.msra.mxu0 0
    %330 = vmatprep.subr.bf16.mxu0 0
    %331 = vmatpush1.bf16.msra.mxu0 0
    %332 = vmatprep.subr.bf16.mxu0 0
    %333 = vmatpush1.bf16.msra.mxu0 0
    %334 = vmatprep.mubr.bf16.mxu0 0
    %335 = vmatmul.mubr.bf16.gmra.mrb[0].mxu0 %v300
    %v336 = vpop.f32.mrb[0].mxu0
    %v337 = vadd.f32 0.0, %v336
    %v338 = vpop.f32.mrb[0].mxu0
    %v339 = vpop.f32.mrb[0].mxu0
    %v340 = vpop.f32.mrb[0].mxu0
    %341 = vdwg.mxu0
    %v342 = vmax.f32 %v337, 0.0
    %v343 = vpack.c.bf16 %v342, %v342
    %vm344 = vcmask 7168
    %v346 = vsel %vm344, %v343, 0
    %vm348 = vcmask 1040384
    %v349 = vsel 0, 4294967295, 65535
    %v350 = vsel %vm348, %v349, 0
    %v352 = vand.u32 %v52, %v350
    %354 = vmatprep.subr.bf16.mxu0 0
    %355 = vmatpush1.bf16.msra.mxu0 %v352
    %356 = vmatprep.subr.bf16.mxu0 0
    %357 = vmatpush1.bf16.msra.mxu0 0
    %358 = vmatprep.subr.bf16.mxu0 0
    %359 = vmatpush1.bf16.msra.mxu0 0
    %360 = vmatprep.subr.bf16.mxu0 0
    %361 = vmatpush1.bf16.msra.mxu0 0
    %362 = vmatprep.subr.bf16.mxu0 0
    %363 = vmatpush1.bf16.msra.mxu0 0
    %364 = vmatprep.subr.bf16.mxu0 0
    %365 = vmatpush1.bf16.msra.mxu0 0
    %366 = vmatprep.subr.bf16.mxu0 0
    %367 = vmatpush1.bf16.msra.mxu0 0
    %368 = vmatprep.subr.bf16.mxu0 0
    %369 = vmatpush1.bf16.msra.mxu0 0
    %370 = vmatprep.subr.bf16.mxu0 0
    %371 = vmatpush1.bf16.msra.mxu0 0
    %372 = vmatprep.subr.bf16.mxu0 0
    %373 = vmatpush1.bf16.msra.mxu0 0
    %374 = vmatprep.subr.bf16.mxu0 0
    %375 = vmatpush1.bf16.msra.mxu0 0
    %376 = vmatprep.subr.bf16.mxu0 0
    %377 = vmatpush1.bf16.msra.mxu0 0
    %378 = vmatprep.subr.bf16.mxu0 0
    %379 = vmatpush1.bf16.msra.mxu0 0
    %380 = vmatprep.subr.bf16.mxu0 0
    %381 = vmatpush1.bf16.msra.mxu0 0
    %382 = vmatprep.subr.bf16.mxu0 0
    %383 = vmatpush1.bf16.msra.mxu0 0
    %384 = vmatprep.subr.bf16.mxu0 0
    %385 = vmatpush1.bf16.msra.mxu0 0
    %386 = vmatprep.mubr.bf16.mxu0 0
    %387 = vmatmul.mubr.bf16.gmra.mrb[0].mxu0 %v346
    %v388 = vpop.f32.mrb[0].mxu0
    %v389 = vadd.f32 0.0, %v388
    %v390 = vpop.f32.mrb[0].mxu0
    %v391 = vpop.f32.mrb[0].mxu0
    %v392 = vpop.f32.mrb[0].mxu0
    %393 = vdwg.mxu0
    %v394 = vmul.f32 %v389, 2.0
    %v395 = vxor.u32 %v394, 2147483648
    %v396 = vmul.f32 %v395, 1.442695
    %v397 = vpow.pop %v396
    %v398 = vadd.f32 %v397, 1.0
    %v399 = vrcp.pop %v398
    %v400 = vmul.f32 1.0, %v399
    %v401 = vmul.f32 %v291, %v400
    %v402 = vsel %vm173, %v401, 0.0
    %403 = vadd.xlane.f32.xlu0 %v402
    %v404 = vpop.xlane.xlu0 %403
    %v405 = vrcp.pop 16.0
    %v406 = vmul.f32 %v404, %v405
    %v407 = vsel %vm173, %v401, -inf
    %408 = vmax.xlane.f32.xlu0 %v407
    %v409 = vpop.xlane.xlu0 %408
    %v410 = vlaneseq
    %v411 = vshrl.u32 %v410, 7
    %v412 = vsub.s32 0, %v411
    %v413 = vrot.slane %v77, %v412
    %v414 = vmul.f32 %v406, %v413
    %v415 = vlaneseq
    %v416 = vshrl.u32 %v415, 7
    %v417 = vsub.s32 1, %v416
    %v418 = vrot.slane %v77, %v417
    %v419 = vmul.f32 %v409, %v418
    %v420 = vadd.f32 %v414, %v419
    %v421 = vlaneseq
    %v422 = vshrl.u32 %v421, 7
    %v423 = vsub.s32 2, %v422
    %v424 = vrot.slane %v77, %v423
    %v425 = vadd.f32 %v420, %v424
    %v426 = vxor.u32 %v425, 2147483648
    %v427 = vmul.f32 %v426, 1.442695
    %v428 = vpow.pop %v427
    %v429 = vadd.f32 %v428, 1.0
    %v430 = vrcp.pop %v429
    %v431 = vmul.f32 1.0, %v430
    %433 = vset.pattern.permute.xlu0 0
    %434 = vperm.xlu0 %433, %v431
    %v435 = vpop.permute.xlu0 %434
    %v437 = vmul.f32 %v401, %v435
    %v438 = vpack.c.bf16 %v437, %v437
    %v439 = vlaneseq
    %v440 = vshrl.u32 %v439, 7
    %v441 = vsub.s32 6, %v440
    %v442 = vrot.slane %v75, %v441
    %v445 = vunpack.c.l.b16 %v53
    %v446 = vunpack.c.l.b16 %v54
    %v447 = vpack.c.b16 %v446, %v445
    %v450 = vsel %vm217, %v438, 0
    %452 = vmatprep.subr.bf16.mxu0 0
    %453 = vmatpush1.bf16.msra.mxu0 %v447
    %454 = vmatprep.subr.bf16.mxu0 0
    %455 = vmatpush1.bf16.msra.mxu0 0
    %456 = vmatprep.subr.bf16.mxu0 0
    %457 = vmatpush1.bf16.msra.mxu0 0
    %458 = vmatprep.subr.bf16.mxu0 0
    %459 = vmatpush1.bf16.msra.mxu0 0
    %460 = vmatprep.subr.bf16.mxu0 0
    %461 = vmatpush1.bf16.msra.mxu0 0
    %462 = vmatprep.subr.bf16.mxu0 0
    %463 = vmatpush1.bf16.msra.mxu0 0
    %464 = vmatprep.subr.bf16.mxu0 0
    %465 = vmatpush1.bf16.msra.mxu0 0
    %466 = vmatprep.subr.bf16.mxu0 0
    %467 = vmatpush1.bf16.msra.mxu0 0
    %468 = vmatprep.subr.bf16.mxu0 0
    %469 = vmatpush1.bf16.msra.mxu0 0
    %470 = vmatprep.subr.bf16.mxu0 0
    %471 = vmatpush1.bf16.msra.mxu0 0
    %472 = vmatprep.subr.bf16.mxu0 0
    %473 = vmatpush1.bf16.msra.mxu0 0
    %474 = vmatprep.subr.bf16.mxu0 0
    %475 = vmatpush1.bf16.msra.mxu0 0
    %476 = vmatprep.subr.bf16.mxu0 0
    %477 = vmatpush1.bf16.msra.mxu0 0
    %478 = vmatprep.subr.bf16.mxu0 0
    %479 = vmatpush1.bf16.msra.mxu0 0
    %480 = vmatprep.subr.bf16.mxu0 0
    %481 = vmatpush1.bf16.msra.mxu0 0
    %482 = vmatprep.subr.bf16.mxu0 0
    %483 = vmatpush1.bf16.msra.mxu0 0
    %484 = vmatprep.mubr.bf16.mxu0 0
    %485 = vmatmul.mubr.bf16.gmra.mrb[0].mxu0 %v450
    %v486 = vpop.f32.mrb[0].mxu0
    %v487 = vadd.f32 %v442, %v486
    %v488 = vpop.f32.mrb[0].mxu0
    %v489 = vpop.f32.mrb[0].mxu0
    %v490 = vpop.f32.mrb[0].mxu0
    %491 = vdwg.mxu0
    %v492 = vmax.f32 %v487, 0.0
    %v493 = vpack.c.bf16 %v492, %v492
    %v494 = vlaneseq
    %v495 = vshrl.u32 %v494, 7
    %v496 = vsub.s32 7, %v495
    %v497 = vrot.slane %v75, %v496
    %v500 = vunpack.c.l.b16 %v55
    %v501 = vunpack.c.l.b16 %v56
    %v502 = vpack.c.b16 %v501, %v500
    %v505 = vsel %vm217, %v493, 0
    %507 = vmatprep.subr.bf16.mxu0 0
    %508 = vmatpush1.bf16.msra.mxu0 %v502
    %509 = vmatprep.subr.bf16.mxu0 0
    %510 = vmatpush1.bf16.msra.mxu0 0
    %511 = vmatprep.subr.bf16.mxu0 0
    %512 = vmatpush1.bf16.msra.mxu0 0
    %513 = vmatprep.subr.bf16.mxu0 0
    %514 = vmatpush1.bf16.msra.mxu0 0
    %515 = vmatprep.subr.bf16.mxu0 0
    %516 = vmatpush1.bf16.msra.mxu0 0
    %517 = vmatprep.subr.bf16.mxu0 0
    %518 = vmatpush1.bf16.msra.mxu0 0
    %519 = vmatprep.subr.bf16.mxu0 0
    %520 = vmatpush1.bf16.msra.mxu0 0
    %521 = vmatprep.subr.bf16.mxu0 0
    %522 = vmatpush1.bf16.msra.mxu0 0
    %523 = vmatprep.subr.bf16.mxu0 0
    %524 = vmatpush1.bf16.msra.mxu0 0
    %525 = vmatprep.subr.bf16.mxu0 0
    %526 = vmatpush1.bf16.msra.mxu0 0
    %527 = vmatprep.subr.bf16.mxu0 0
    %528 = vmatpush1.bf16.msra.mxu0 0
    %529 = vmatprep.subr.bf16.mxu0 0
    %530 = vmatpush1.bf16.msra.mxu0 0
    %531 = vmatprep.subr.bf16.mxu0 0
    %532 = vmatpush1.bf16.msra.mxu0 0
    %533 = vmatprep.subr.bf16.mxu0 0
    %534 = vmatpush1.bf16.msra.mxu0 0
    %535 = vmatprep.subr.bf16.mxu0 0
    %536 = vmatpush1.bf16.msra.mxu0 0
    %537 = vmatprep.subr.bf16.mxu0 0
    %538 = vmatpush1.bf16.msra.mxu0 0
    %539 = vmatprep.mubr.bf16.mxu0 0
    %540 = vmatmul.mubr.bf16.gmra.mrb[0].mxu0 %v505
    %v541 = vpop.f32.mrb[0].mxu0
    %v542 = vadd.f32 %v497, %v541
    %v543 = vpop.f32.mrb[0].mxu0
    %v544 = vpop.f32.mrb[0].mxu0
    %v545 = vpop.f32.mrb[0].mxu0
    %546 = vdwg.mxu0
    %v547 = vpack.c.bf16 %v542, %v542
    %v550 = vunpack.c.l.b16 %v57
    %v551 = vunpack.c.l.b16 %v58
    %v552 = vpack.c.b16 %v551, %v550
    %v555 = vsel %vm217, %v547, 0
    %557 = vmatprep.subr.bf16.mxu0 0
    %558 = vmatpush1.bf16.msra.mxu0 %v552
    %559 = vmatprep.subr.bf16.mxu0 0
    %560 = vmatpush1.bf16.msra.mxu0 0
    %561 = vmatprep.subr.bf16.mxu0 0
    %562 = vmatpush1.bf16.msra.mxu0 0
    %563 = vmatprep.subr.bf16.mxu0 0
    %564 = vmatpush1.bf16.msra.mxu0 0
    %565 = vmatprep.subr.bf16.mxu0 0
    %566 = vmatpush1.bf16.msra.mxu0 0
    %567 = vmatprep.subr.bf16.mxu0 0
    %568 = vmatpush1.bf16.msra.mxu0 0
    %569 = vmatprep.subr.bf16.mxu0 0
    %570 = vmatpush1.bf16.msra.mxu0 0
    %571 = vmatprep.subr.bf16.mxu0 0
    %572 = vmatpush1.bf16.msra.mxu0 0
    %573 = vmatprep.subr.bf16.mxu0 0
    %574 = vmatpush1.bf16.msra.mxu0 0
    %575 = vmatprep.subr.bf16.mxu0 0
    %576 = vmatpush1.bf16.msra.mxu0 0
    %577 = vmatprep.subr.bf16.mxu0 0
    %578 = vmatpush1.bf16.msra.mxu0 0
    %579 = vmatprep.subr.bf16.mxu0 0
    %580 = vmatpush1.bf16.msra.mxu0 0
    %581 = vmatprep.subr.bf16.mxu0 0
    %582 = vmatpush1.bf16.msra.mxu0 0
    %583 = vmatprep.subr.bf16.mxu0 0
    %584 = vmatpush1.bf16.msra.mxu0 0
    %585 = vmatprep.subr.bf16.mxu0 0
    %586 = vmatpush1.bf16.msra.mxu0 0
    %587 = vmatprep.subr.bf16.mxu0 0
    %588 = vmatpush1.bf16.msra.mxu0 0
    %589 = vmatprep.mubr.bf16.mxu0 0
    %590 = vmatmul.mubr.bf16.gmra.mrb[0].mxu0 %v555
    %v591 = vpop.f32.mrb[0].mxu0
    %v592 = vadd.f32 0.0, %v591
    %v593 = vpop.f32.mrb[0].mxu0
    %v594 = vpop.f32.mrb[0].mxu0
    %v595 = vpop.f32.mrb[0].mxu0
    %596 = vdwg.mxu0
    %vm597 = vcmask 517120
    %v598 = vsel %vm597, %v592, -inf
    %599 = vmax.xlane.f32.xlu0 %v598
    %v600 = vpop.xlane.xlu0 %599
    %v601 = vsub.f32 %v592, %v600
    %v602 = vmul.f32 %v601, 1.442695
    %v603 = vpow.pop %v602
    %v604 = vsel %vm597, %v603, 0.0
    %605 = vadd.xlane.f32.xlu0 %v604
    %v606 = vpop.xlane.xlu0 %605
    %v607 = vrcp.pop %v606
    %v608 = vmul.f32 %v603, %v607
    %v609 = vpack.c.bf16 %v608, %v608
    %v618 = vunpack.c.l.b16 %v59
    %v619 = vunpack.c.l.b16 %v60
    %v620 = vunpack.c.l.b16 %v61
    %v621 = vunpack.c.l.b16 %v62
    %v622 = vunpack.c.l.b16 %v63
    %v623 = vunpack.c.l.b16 %v64
    %v624 = vunpack.c.l.b16 %v65
    %v625 = vunpack.c.l.b16 %v66
    %v626 = vpack.c.b16 %v619, %v618
    %v627 = vpack.c.b16 %v621, %v620
    %v628 = vpack.c.b16 %v623, %v622
    %v629 = vpack.c.b16 %v625, %v624
    %vm634 = vcmask 523264
    %v636 = vsel %vm634, %v609, 0
    %638 = vmatprep.subr.bf16.mxu0 0
    %639 = vmatpush1.bf16.msra.mxu0 %v626
    %640 = vmatprep.subr.bf16.mxu0 0
    %641 = vmatpush1.bf16.msra.mxu0 %v627
    %642 = vmatprep.subr.bf16.mxu0 0
    %643 = vmatpush1.bf16.msra.mxu0 %v628
    %644 = vmatprep.subr.bf16.mxu0 0
    %645 = vmatpush1.bf16.msra.mxu0 %v629
    %646 = vmatprep.subr.bf16.mxu0 0
    %647 = vmatpush1.bf16.msra.mxu0 0
    %648 = vmatprep.subr.bf16.mxu0 0
    %649 = vmatpush1.bf16.msra.mxu0 0
    %650 = vmatprep.subr.bf16.mxu0 0
    %651 = vmatpush1.bf16.msra.mxu0 0
    %652 = vmatprep.subr.bf16.mxu0 0
    %653 = vmatpush1.bf16.msra.mxu0 0
    %654 = vmatprep.subr.bf16.mxu0 0
    %655 = vmatpush1.bf16.msra.mxu0 0
    %656 = vmatprep.subr.bf16.mxu0 0
    %657 = vmatpush1.bf16.msra.mxu0 0
    %658 = vmatprep.subr.bf16.mxu0 0
    %659 = vmatpush1.bf16.msra.mxu0 0
    %660 = vmatprep.subr.bf16.mxu0 0
    %661 = vmatpush1.bf16.msra.mxu0 0
    %662 = vmatprep.subr.bf16.mxu0 0
    %663 = vmatpush1.bf16.msra.mxu0 0
    %664 = vmatprep.subr.bf16.mxu0 0
    %665 = vmatpush1.bf16.msra.mxu0 0
    %666 = vmatprep.subr.bf16.mxu0 0
    %667 = vmatpush1.bf16.msra.mxu0 0
    %668 = vmatprep.subr.bf16.mxu0 0
    %669 = vmatpush1.bf16.msra.mxu0 0
    %670 = vmatprep.mubr.bf16.mxu0 0
    %671 = vmatmul.mubr.bf16.gmra.mrb[0].mxu0 %v636
    %v672 = vpop.f32.mrb[0].mxu0
    %v673 = vadd.f32 0.0, %v672
    %v674 = vpop.f32.mrb[0].mxu0
    %v675 = vpop.f32.mrb[0].mxu0
    %v676 = vpop.f32.mrb[0].mxu0
    %677 = vdwg.mxu0
    %679 = vrot.lane.b32.xlu0 %v673, 16
    %v680 = vpop.permute.xlu0 %679
    %v682 = vsel %vm217, %v437, %v680
    %v683 = vpack.c.bf16 %v682, %v682
    %v684 = vlaneseq
    %v685 = vshrl.u32 %v684, 7
    %v686 = vsub.s32 0, %v685
    %v687 = vrot.slane %v76, %v686
    %v692 = vunpack.c.l.b16 %v67
    %v693 = vunpack.c.l.b16 %v68
    %v694 = vunpack.c.l.b16 %v69
    %v695 = vunpack.c.l.b16 %v70
    %v696 = vpack.c.b16 %v693, %v692
    %v697 = vpack.c.b16 %v695, %v694
    %vm700 = vcmask 261120
    %v702 = vsel %vm700, %v683, 0
    %704 = vmatprep.subr.bf16.mxu0 0
    %705 = vmatpush1.bf16.msra.mxu0 %v696
    %706 = vmatprep.subr.bf16.mxu0 0
    %707 = vmatpush1.bf16.msra.mxu0 %v697
    %708 = vmatprep.subr.bf16.mxu0 0
    %709 = vmatpush1.bf16.msra.mxu0 0
    %710 = vmatprep.subr.bf16.mxu0 0
    %711 = vmatpush1.bf16.msra.mxu0 0
    %712 = vmatprep.subr.bf16.mxu0 0
    %713 = vmatpush1.bf16.msra.mxu0 0
    %714 = vmatprep.subr.bf16.mxu0 0
    %715 = vmatpush1.bf16.msra.mxu0 0
    %716 = vmatprep.subr.bf16.mxu0 0
    %717 = vmatpush1.bf16.msra.mxu0 0
    %718 = vmatprep.subr.bf16.mxu0 0
    %719 = vmatpush1.bf16.msra.mxu0 0
    %720 = vmatprep.subr.bf16.mxu0 0
    %721 = vmatpush1.bf16.msra.mxu0 0
    %722 = vmatprep.subr.bf16.mxu0 0
    %723 = vmatpush1.bf16.msra.mxu0 0
    %724 = vmatprep.subr.bf16.mxu0 0
    %725 = vmatpush1.bf16.msra.mxu0 0
    %726 = vmatprep.subr.bf16.mxu0 0
    %727 = vmatpush1.bf16.msra.mxu0 0
    %728 = vmatprep.subr.bf16.mxu0 0
    %729 = vmatpush1.bf16.msra.mxu0 0
    %730 = vmatprep.subr.bf16.mxu0 0
    %731 = vmatpush1.bf16.msra.mxu0 0
    %732 = vmatprep.subr.bf16.mxu0 0
    %733 = vmatpush1.bf16.msra.mxu0 0
    %734 = vmatprep.subr.bf16.mxu0 0
    %735 = vmatpush1.bf16.msra.mxu0 0
    %736 = vmatprep.mubr.bf16.mxu0 0
    %737 = vmatmul.mubr.bf16.gmra.mrb[0].mxu0 %v702
    %v738 = vpop.f32.mrb[0].mxu0
    %v739 = vadd.f32 %v687, %v738
    %v740 = vpop.f32.mrb[0].mxu0
    %v741 = vpop.f32.mrb[0].mxu0
    %v742 = vpop.f32.mrb[0].mxu0
    %743 = vdwg.mxu0
    %v744 = vxor.u32 %v739, 2147483648
    %v745 = vmul.f32 %v744, 1.442695
    %v746 = vpow.pop %v745
    %v747 = vadd.f32 %v746, 1.0
    %v748 = vrcp.pop %v747
    %v749 = vmul.f32 1.0, %v748
    %v750 = vmul.f32 %v749, %v673
    %v751 = vsub.f32 1.0, %v749
    %v752 = vmul.f32 %v751, %v437
    %v753 = vadd.f32 %v750, %v752
    %v754 = vmul.f32 %v753, 0.1
    %vm755 = vcmp.ge.f32.partialorder %v754, 1.0
    %v756 = vsel %vm755, 1, 0
    %v757 = vcvt.s32.f32 %v756
    %v758 = vpack.c.bf16 %v757, %v757
    %v759 = vlaneseq
    %v760 = vshrl.u32 %v759, 7
    %v761 = vsub.s32 3, %v760
    %v762 = vrot.slane %v76, %v761
    %v765 = vunpack.c.l.b16 %v71
    %v766 = vunpack.c.l.b16 %v72
    %v767 = vpack.c.b16 %v766, %v765
    %v770 = vsel %vm217, %v758, 0
    %772 = vmatprep.subr.bf16.mxu0 0
    %773 = vmatpush1.bf16.msra.mxu0 %v767
    %774 = vmatprep.subr.bf16.mxu0 0
    %775 = vmatpush1.bf16.msra.mxu0 0
    %776 = vmatprep.subr.bf16.mxu0 0
    %777 = vmatpush1.bf16.msra.mxu0 0
    %778 = vmatprep.subr.bf16.mxu0 0
    %779 = vmatpush1.bf16.msra.mxu0 0
    %780 = vmatprep.subr.bf16.mxu0 0
    %781 = vmatpush1.bf16.msra.mxu0 0
    %782 = vmatprep.subr.bf16.mxu0 0
    %783 = vmatpush1.bf16.msra.mxu0 0
    %784 = vmatprep.subr.bf16.mxu0 0
    %785 = vmatpush1.bf16.msra.mxu0 0
    %786 = vmatprep.subr.bf16.mxu0 0
    %787 = vmatpush1.bf16.msra.mxu0 0
    %788 = vmatprep.subr.bf16.mxu0 0
    %789 = vmatpush1.bf16.msra.mxu0 0
    %790 = vmatprep.subr.bf16.mxu0 0
    %791 = vmatpush1.bf16.msra.mxu0 0
    %792 = vmatprep.subr.bf16.mxu0 0
    %793 = vmatpush1.bf16.msra.mxu0 0
    %794 = vmatprep.subr.bf16.mxu0 0
    %795 = vmatpush1.bf16.msra.mxu0 0
    %796 = vmatprep.subr.bf16.mxu0 0
    %797 = vmatpush1.bf16.msra.mxu0 0
    %798 = vmatprep.subr.bf16.mxu0 0
    %799 = vmatpush1.bf16.msra.mxu0 0
    %800 = vmatprep.subr.bf16.mxu0 0
    %801 = vmatpush1.bf16.msra.mxu0 0
    %802 = vmatprep.subr.bf16.mxu0 0
    %803 = vmatpush1.bf16.msra.mxu0 0
    %804 = vmatprep.mubr.bf16.mxu0 0
    %805 = vmatmul.mubr.bf16.gmra.mrb[0].mxu0 %v770
    %v806 = vpop.f32.mrb[0].mxu0
    %v807 = vadd.f32 %v762, %v806
    %v808 = vpop.f32.mrb[0].mxu0
    %v809 = vpop.f32.mrb[0].mxu0
    %v810 = vpop.f32.mrb[0].mxu0
    %811 = vdwg.mxu0
    %v812 = vsel %vm173, %v807, 0.0
    %v813 = vrot.slane %v812, 4
    %v814 = vadd.f32 %v812, %v813
    %v815 = vrot.slane %v814, 2
    %v816 = vadd.f32 %v814, %v815
    %v817 = vrot.slane %v816, 1
    %v818 = vadd.f32 %v816, %v817
    %v819 = vmul.f32 %v818, %v140
    %v820 = vsub.f32 %v807, %v819
    %v821 = vmul.f32 %v820, %v820
    %v822 = vsel %vm173, %v821, 0.0
    %v823 = vrot.slane %v822, 4
    %v824 = vadd.f32 %v822, %v823
    %v825 = vrot.slane %v824, 2
    %v826 = vadd.f32 %v824, %v825
    %v827 = vrot.slane %v826, 1
    %v828 = vadd.f32 %v826, %v827
    %v829 = vmul.f32 %v828, %v140
    %v830 = vadd.f32 %v829, 1e-05
    %v831 = vrsqrt.pop %v830
    %v832 = vmul.f32 %v820, %v831
    %v833 = vlaneseq
    %v834 = vshrl.u32 %v833, 7
    %v835 = vsub.s32 4, %v834
    %v836 = vrot.slane %v76, %v835
    %v837 = vmul.f32 %v832, %v836
    %v838 = vlaneseq
    %v839 = vshrl.u32 %v838, 7
    %v840 = vsub.s32 5, %v839
    %v841 = vrot.slane %v76, %v840
    %v842 = vadd.f32 %v837, %v841
    %v843 = vmax.f32 %v842, 0.0
    %v844 = vpack.c.bf16 %v843, %v843
    %v845 = vlaneseq
    %v846 = vshrl.u32 %v845, 7
    %v847 = vsub.s32 6, %v846
    %v848 = vrot.slane %v76, %v847
    %v851 = vunpack.c.l.b16 %v73
    %v852 = vunpack.c.l.b16 %v74
    %v853 = vpack.c.b16 %v852, %v851
    %v856 = vsel %vm217, %v844, 0
    %858 = vmatprep.subr.bf16.mxu0 0
    %859 = vmatpush1.bf16.msra.mxu0 %v853
    %860 = vmatprep.subr.bf16.mxu0 0
    %861 = vmatpush1.bf16.msra.mxu0 0
    %862 = vmatprep.subr.bf16.mxu0 0
    %863 = vmatpush1.bf16.msra.mxu0 0
    %864 = vmatprep.subr.bf16.mxu0 0
    %865 = vmatpush1.bf16.msra.mxu0 0
    %866 = vmatprep.subr.bf16.mxu0 0
    %867 = vmatpush1.bf16.msra.mxu0 0
    %868 = vmatprep.subr.bf16.mxu0 0
    %869 = vmatpush1.bf16.msra.mxu0 0
    %870 = vmatprep.subr.bf16.mxu0 0
    %871 = vmatpush1.bf16.msra.mxu0 0
    %872 = vmatprep.subr.bf16.mxu0 0
    %873 = vmatpush1.bf16.msra.mxu0 0
    %874 = vmatprep.subr.bf16.mxu0 0
    %875 = vmatpush1.bf16.msra.mxu0 0
    %876 = vmatprep.subr.bf16.mxu0 0
    %877 = vmatpush1.bf16.msra.mxu0 0
    %878 = vmatprep.subr.bf16.mxu0 0
    %879 = vmatpush1.bf16.msra.mxu0 0
    %880 = vmatprep.subr.bf16.mxu0 0
    %881 = vmatpush1.bf16.msra.mxu0 0
    %882 = vmatprep.subr.bf16.mxu0 0
    %883 = vmatpush1.bf16.msra.mxu0 0
    %884 = vmatprep.subr.bf16.mxu0 0
    %885 = vmatpush1.bf16.msra.mxu0 0
    %886 = vmatprep.subr.bf16.mxu0 0
    %887 = vmatpush1.bf16.msra.mxu0 0
    %888 = vmatprep.subr.bf16.mxu0 0
    %889 = vmatpush1.bf16.msra.mxu0 0
    %890 = vmatprep.mubr.bf16.mxu0 0
    %891 = vmatmul.mubr.bf16.gmra.mrb[0].mxu0 %v856
    %v892 = vpop.f32.mrb[0].mxu0
    %v893 = vadd.f32 %v848, %v892
    %v894 = vpop.f32.mrb[0].mxu0
    %v895 = vpop.f32.mrb[0].mxu0
    %v896 = vpop.f32.mrb[0].mxu0
    %897 = vdwg.mxu0
    %v898 = vlaneseq
    %v899 = vshrl.u32 %v898, 7
    %v900 = vsub.s32 7, %v899
    %v901 = vrot.slane %v76, %v900
    %v902 = vmul.f32 %v893, %v901
    %v903 = vsel %vm173, %v902, 0.0
    %904 = vadd.xlane.f32.xlu0 %v903
    %v905 = vpop.xlane.xlu0 %904
    %v906 = vlaneseq
    %v907 = vshrl.u32 %v906, 7
    %v908 = vsub.s32 3, %v907
    %v909 = vrot.slane %v77, %v908
    %v910 = vadd.f32 %v905, %v909
    %v911 = vxor.u32 %v910, 2147483648
    %v912 = vmul.f32 %v911, 1.442695
    %v913 = vpow.pop %v912
    %v914 = vadd.f32 %v913, 1.0
    %v915 = vrcp.pop %v914
    %v916 = vmul.f32 1.0, %v915
    %918 = vrot.lane.b32.xlu0 %v172, 112
    %v919 = vpop.permute.xlu0 %918
    %v921 = vadd.f32 %v757, %v919
    %v922 = vmax.f32 %v921, 0.0
    %923 = vst [vmem:[#allocation2] sm:$0x3] 0.0
    %924 = vst.msk [vmem:[#allocation2] sm:$0x3] %vm173, %v922
    %926 = vrot.lane.b32.xlu0 %v757, 16
    %v927 = vpop.permute.xlu0 %926
    %929 = vst.msk [vmem:[#allocation2] sm:$0x3] %vm132, %v927
    %931 = vrot.lane.b32.xlu0 %v608, 32
    %v932 = vpop.permute.xlu0 %931
    %vm934 = vcmask 779520
    %935 = vst.msk [vmem:[#allocation2] sm:$0x3] %vm934, %v932
    %937 = vrot.lane.b32.xlu0 %v916, 96
    %v938 = vpop.permute.xlu0 %937
    %vm940 = vcmask 788224
    %941 = vst.msk [vmem:[#allocation2] sm:$0x3] %vm940, %v938
    // Predicated region
    $region54: #{tpu_custom_call.1} parent=1 // pred_check
      _
    $region55: #{tpu_custom_call.1} parent=1 // pred_check_branch
      %943 = sbr.rel (0) target = $region57
    $region56: #{tpu_custom_call.1} parent=1 // pred_region
      %s945 = ssub.s32 32, 32
      %946 = vsyncadd [#allocation3], %s945
      %s948 = sshll.u32 [#allocation2], 4
      %s949 = int_to_ptr.vmem [resolvable:$true] %s948
      %951 = dma.vmem_to_hbm [thread:$0]  %s949, 32, %s13, [#allocation3]
    $region57: #{tpu_custom_call.1} parent=1 // pred_fallthru
      _
    // Predicated region
    $region58: #{tpu_custom_call.1} parent=1 // pred_check
      _
    $region59: #{tpu_custom_call.1} parent=1 // pred_check_branch
      %953 = sbr.rel (0) target = $region61
    $region60: #{tpu_custom_call.1} parent=1 // pred_region
      %954 = dma.done [#allocation3], 32
    $region61: #{tpu_custom_call.1} parent=1 // pred_fallthru
      _
    %955 = vsyncpa [#allocation3], 1

</llo_original>
